<compile_context>
chip_gen: v7x
topology: tpu7x:2x2x1
jax: 0.10.0
libtpu: 0.0.40
codegen_flags: <defaults>
</compile_context>

<pallas_src>
import jax
import jax.numpy as jnp
from jax import lax
from jax.experimental import pallas as pl
from jax.experimental.pallas import tpu as pltpu


def _dsconv_kernel(x_ref, wp_ref, wd_ref, o_ref, pad_ref):
    # x_ref:   (1, H, W, Cin)        input tile (one batch element, all input channels)
    # wp_ref:  (Cin, TC)             pointwise weights for this output-channel tile
    # wd_ref:  (9, TC)               depthwise weights, row k = tap (ky*3 + kx)
    # o_ref:   (1, H, W, TC)         output tile
    # pad_ref: (H+2, W+16, TC) f32   scratch; interior lives at [1:H+1, 8:8+W, :]
    _, H, W, Cin = x_ref.shape
    TC = o_ref.shape[3]

    # --- re-zero only the halo strips (aligned writes; interior is overwritten below).
    zrow = jnp.zeros((W + 16, TC), jnp.float32)
    pad_ref[0] = zrow
    pad_ref[H + 1] = zrow
    zcol = jnp.zeros((H, 8, TC), jnp.float32)
    pad_ref[1:H + 1, 0:8, :] = zcol
    pad_ref[1:H + 1, W + 8:W + 16, :] = zcol

    # --- pointwise 1x1 conv: channel contraction on the MXU, f32 accumulation.
    x = x_ref[0]                                              # (H, W, Cin), caller dtype
    h1 = jnp.dot(x.reshape(H * W, Cin), wp_ref[...],
                 preferred_element_type=jnp.float32)          # (H*W, TC) f32
    # Sublane-aligned interior write (column offset 8).
    pad_ref[1:H + 1, 8:8 + W, :] = h1.reshape(H, W, TC)

    # --- depthwise 3x3 (padding=1): 9 shifted windows, per-channel (lane) scale.
    wd = wd_ref[...].astype(jnp.float32).reshape(9, 1, 1, TC)  # hoisted out of tap loop
    acc = jnp.zeros((H, W, TC), jnp.float32)
    for ky in range(3):
        for kx in range(3):
            win = pad_ref[ky:ky + H, kx + 7:kx + 7 + W, :]     # (H, W, TC) f32
            acc = acc + win * wd[ky * 3 + kx]
    o_ref[0] = acc.astype(o_ref.dtype)


def depthwise_separable_conv2d_nhwc(x_nhwc, wp, wd):
    """NHWC entry point (no layout transposes in the hot path).

    x_nhwc: (N, H, W, Cin); wp: (Cin, Cout); wd: (9, Cout) with row k = tap (ky*3+kx).
    Returns (N, H, W, Cout).
    """
    N, H, W, Cin = x_nhwc.shape
    Cout = wp.shape[1]

    # Tile the output-channel axis at <=128 lanes per grid step.
    TC = Cout if Cout <= 128 else 128
    Cout_p = -(-Cout // TC) * TC
    if Cout_p != Cout:
        wp = jnp.pad(wp, ((0, 0), (0, Cout_p - Cout)))
        wd = jnp.pad(wd, ((0, 0), (0, Cout_p - Cout)))
    wp = wp.astype(x_nhwc.dtype)
    wd = wd.astype(x_nhwc.dtype)

    grid = (N, Cout_p // TC)
    flops = 2 * N * H * W * Cin * Cout_p + 2 * 9 * N * H * W * Cout_p
    itemsize = jnp.dtype(x_nhwc.dtype).itemsize
    bytes_accessed = itemsize * (N * H * W * Cin + N * H * W * Cout_p
                                 + Cin * Cout_p + 9 * Cout_p)

    out = pl.pallas_call(
        _dsconv_kernel,
        out_shape=jax.ShapeDtypeStruct((N, H, W, Cout_p), x_nhwc.dtype),
        grid_spec=pltpu.PrefetchScalarGridSpec(
            num_scalar_prefetch=0,
            grid=grid,
            in_specs=[
                pl.BlockSpec((1, H, W, Cin), lambda n, c: (n, 0, 0, 0)),
                pl.BlockSpec((Cin, TC), lambda n, c: (0, c)),
                pl.BlockSpec((9, TC), lambda n, c: (0, c)),
            ],
            out_specs=pl.BlockSpec((1, H, W, TC), lambda n, c: (n, 0, 0, c)),
            scratch_shapes=[pltpu.VMEM((H + 2, W + 16, TC), jnp.float32)],
        ),
        compiler_params=pltpu.CompilerParams(
            dimension_semantics=("parallel", "parallel")),
        cost_estimate=pl.CostEstimate(
            flops=flops, transcendentals=0, bytes_accessed=bytes_accessed),
    )(x_nhwc, wp, wd)

    if Cout_p != Cout:
        out = out[..., :Cout]
    return out


@jax.jit
def depthwise_separable_conv2d(x_nchw, w_pointwise, w_depthwise):
    """PyTorch-layout boundary: x (N, Cin, H, W), w_pointwise (Cout, Cin, 1, 1),
    w_depthwise (Cout, 1, 3, 3).  Returns (N, Cout, H, W)."""
    Cout = w_pointwise.shape[0]
    x = jnp.transpose(x_nchw, (0, 2, 3, 1))                               # NCHW -> NHWC
    wp = jnp.transpose(w_pointwise[:, :, 0, 0], (1, 0))                   # (Cin, Cout)
    wd = jnp.transpose(w_depthwise[:, 0, :, :].reshape(Cout, 9), (1, 0))  # (9, Cout)
    out = depthwise_separable_conv2d_nhwc(x, wp, wd)
    return jnp.transpose(out, (0, 3, 1, 2))                               # NHWC -> NCHW


def _reference(x, w_pw, w_dw):
    out = lax.conv_general_dilated(
        x, w_pw, window_strides=(1, 1), padding="VALID",
        dimension_numbers=("NCHW", "OIHW", "NCHW"))
    out = lax.conv_general_dilated(
        out, w_dw, window_strides=(1, 1), padding=((1, 1), (1, 1)),
        dimension_numbers=("NCHW", "OIHW", "NCHW"),
        feature_group_count=w_dw.shape[0])
    return out


if __name__ == "__main__":
    N, Cin, Cout, H, W = 2, 4, 8, 16, 16
    key = jax.random.PRNGKey(0)
    k_x, k_pw, k_dw = jax.random.split(key, 3)

    x = jax.random.normal(k_x, (N, Cin, H, W), dtype=jnp.float32)
    # Deterministic synthetic parameters with PyTorch conv weight shapes.
    w_pw = jax.random.normal(k_pw, (Cout, Cin, 1, 1), dtype=jnp.float32) * 0.1
    w_dw = jax.random.normal(k_dw, (Cout, 1, 3, 3), dtype=jnp.float32) * 0.1

    out = jax.block_until_ready(depthwise_separable_conv2d(x, w_pw, w_dw))
    ref = _reference(x, w_pw, w_dw)
    assert out.shape == (N, Cout, H, W)
    assert jnp.allclose(out, ref, atol=1e-4, rtol=1e-4)
    print("KERNEL_OK")
</pallas_src>

<mosaic_0001>
module attributes {stable_mosaic.version = 11 : i64} {
  func.func @_dsconv_kernel(%arg0: i32, %arg1: i32, %arg2: memref<1x16x16x4xf32, #tpu.memory_space<vmem>>, %arg3: memref<4x8xf32, #tpu.memory_space<vmem>>, %arg4: memref<9x8xf32, #tpu.memory_space<vmem>>, %arg5: memref<1x16x16x8xf32, #tpu.memory_space<vmem>>, %arg6: memref<18x32x8xf32, #tpu.memory_space<vmem>>) attributes {dimension_semantics = [#tpu.dimension_semantics<parallel>, #tpu.dimension_semantics<parallel>], iteration_bounds = array<i64: 2, 1>, scalar_prefetch = 0 : i64, scratch_operands = 1 : i64, tpu.core_type = #tpu.core_type<tc>, window_params = [{transform_indices = @transform_0, window_bounds = array<i64: 1, 16, 16, 4>}, {transform_indices = @transform_1, window_bounds = array<i64: 4, 8>}, {transform_indices = @transform_2, window_bounds = array<i64: 9, 8>}, {transform_indices = @transform_3, window_bounds = array<i64: 1, 16, 16, 8>}]} {
    %cst = arith.constant 0.000000e+00 : f32
    %0 = vector.broadcast %cst : f32 to vector<32x8xf32>
    %c0 = arith.constant 0 : index
    %c0_0 = arith.constant 0 : index
    %c0_1 = arith.constant 0 : index
    %1 = vector.load %arg6[%c0, %c0_0, %c0_1] : memref<18x32x8xf32, #tpu.memory_space<vmem>>, vector<1x32x8xf32>
    %2 = vector.shape_cast %1 : vector<1x32x8xf32> to vector<32x8xf32>
    %3 = vector.shape_cast %0 : vector<32x8xf32> to vector<1x32x8xf32>
    tpu.vector_store %arg6[%c0, %c0_0, %c0_1], %3 {strides = array<i32>} : memref<18x32x8xf32, #tpu.memory_space<vmem>>, vector<1x32x8xf32>,
    %c17 = arith.constant 17 : index
    %c0_2 = arith.constant 0 : index
    %c0_3 = arith.constant 0 : index
    %4 = vector.load %arg6[%c17, %c0_2, %c0_3] : memref<18x32x8xf32, #tpu.memory_space<vmem>>, vector<1x32x8xf32>
    %5 = vector.shape_cast %4 : vector<1x32x8xf32> to vector<32x8xf32>
    %6 = vector.shape_cast %0 : vector<32x8xf32> to vector<1x32x8xf32>
    tpu.vector_store %arg6[%c17, %c0_2, %c0_3], %6 {strides = array<i32>} : memref<18x32x8xf32, #tpu.memory_space<vmem>>, vector<1x32x8xf32>,
    %cst_4 = arith.constant 0.000000e+00 : f32
    %7 = vector.broadcast %cst_4 : f32 to vector<16x8x8xf32>
    %c1 = arith.constant 1 : index
    %c0_5 = arith.constant 0 : index
    %c0_6 = arith.constant 0 : index
    %8 = vector.load %arg6[%c1, %c0_5, %c0_6] : memref<18x32x8xf32, #tpu.memory_space<vmem>>, vector<16x8x8xf32>
    tpu.vector_store %arg6[%c1, %c0_5, %c0_6], %7 {strides = array<i32>} : memref<18x32x8xf32, #tpu.memory_space<vmem>>, vector<16x8x8xf32>,
    %c1_7 = arith.constant 1 : index
    %c24 = arith.constant 24 : index
    %c0_8 = arith.constant 0 : index
    %9 = vector.load %arg6[%c1_7, %c24, %c0_8] : memref<18x32x8xf32, #tpu.memory_space<vmem>>, vector<16x8x8xf32>
    tpu.vector_store %arg6[%c1_7, %c24, %c0_8], %7 {strides = array<i32>} : memref<18x32x8xf32, #tpu.memory_space<vmem>>, vector<16x8x8xf32>,
    %c0_9 = arith.constant 0 : index
    %c0_10 = arith.constant 0 : index
    %c0_11 = arith.constant 0 : index
    %c0_12 = arith.constant 0 : index
    %10 = vector.load %arg2[%c0_9, %c0_10, %c0_11, %c0_12] : memref<1x16x16x4xf32, #tpu.memory_space<vmem>>, vector<1x16x16x4xf32>
    %11 = vector.shape_cast %10 : vector<1x16x16x4xf32> to vector<16x16x4xf32>
    %12 = vector.shape_cast %11 : vector<16x16x4xf32> to vector<256x4xf32>
    %c0_13 = arith.constant 0 : index
    %c0_14 = arith.constant 0 : index
    %13 = vector.load %arg3[%c0_13, %c0_14] : memref<4x8xf32, #tpu.memory_space<vmem>>, vector<4x8xf32>
    %cst_15 = arith.constant dense<0.000000e+00> : vector<256x8xf32>
    %14 = tpu.matmul %12, %13, %cst_15 {dimension_numbers = #tpu.dot_dimension_numbers<[1], [0], [0], [1], [0, 0, 1, 1], [], []>} : vector<256x4xf32>, vector<4x8xf32>, vector<256x8xf32> -> vector<256x8xf32>
    %15 = vector.shape_cast %14 : vector<256x8xf32> to vector<16x16x8xf32>
    %c1_16 = arith.constant 1 : index
    %c8 = arith.constant 8 : index
    %c0_17 = arith.constant 0 : index
    %16 = vector.load %arg6[%c1_16, %c8, %c0_17] : memref<18x32x8xf32, #tpu.memory_space<vmem>>, vector<16x16x8xf32>
    tpu.vector_store %arg6[%c1_16, %c8, %c0_17], %15 {strides = array<i32>} : memref<18x32x8xf32, #tpu.memory_space<vmem>>, vector<16x16x8xf32>,
    %c0_18 = arith.constant 0 : index
    %c0_19 = arith.constant 0 : index
    %17 = vector.load %arg4[%c0_18, %c0_19] : memref<9x8xf32, #tpu.memory_space<vmem>>, vector<9x8xf32>
    %18 = vector.shape_cast %17 : vector<9x8xf32> to vector<9x1x1x8xf32>
    %cst_20 = arith.constant 0.000000e+00 : f32
    %19 = vector.broadcast %cst_20 : f32 to vector<16x16x8xf32>
    %c0_21 = arith.constant 0 : index
    %c7 = arith.constant 7 : index
    %c0_22 = arith.constant 0 : index
    %20 = vector.load %arg6[%c0_21, %c7, %c0_22] : memref<18x32x8xf32, #tpu.memory_space<vmem>>, vector<16x16x8xf32>
    %21 = vector.extract_strided_slice %18 {offsets = [0, 0, 0, 0], sizes = [1, 1, 1, 8], strides = [1, 1, 1, 1]} : vector<9x1x1x8xf32> to vector<1x1x1x8xf32>
    %22 = vector.shape_cast %21 : vector<1x1x1x8xf32> to vector<1x1x8xf32>
    %23 = vector.broadcast %22 : vector<1x1x8xf32> to vector<16x16x8xf32>
    %24 = arith.mulf %20, %23 : vector<16x16x8xf32>
    %25 = arith.addf %19, %24 : vector<16x16x8xf32>
    %c0_23 = arith.constant 0 : index
    %c8_24 = arith.constant 8 : index
    %c0_25 = arith.constant 0 : index
    %26 = vector.load %arg6[%c0_23, %c8_24, %c0_25] : memref<18x32x8xf32, #tpu.memory_space<vmem>>, vector<16x16x8xf32>
    %27 = vector.extract_strided_slice %18 {offsets = [1, 0, 0, 0], sizes = [1, 1, 1, 8], strides = [1, 1, 1, 1]} : vector<9x1x1x8xf32> to vector<1x1x1x8xf32>
    %28 = vector.shape_cast %27 : vector<1x1x1x8xf32> to vector<1x1x8xf32>
    %29 = vector.broadcast %28 : vector<1x1x8xf32> to vector<16x16x8xf32>
    %30 = arith.mulf %26, %29 : vector<16x16x8xf32>
    %31 = arith.addf %25, %30 : vector<16x16x8xf32>
    %c0_26 = arith.constant 0 : index
    %c9 = arith.constant 9 : index
    %c0_27 = arith.constant 0 : index
    %32 = vector.load %arg6[%c0_26, %c9, %c0_27] : memref<18x32x8xf32, #tpu.memory_space<vmem>>, vector<16x16x8xf32>
    %33 = vector.extract_strided_slice %18 {offsets = [2, 0, 0, 0], sizes = [1, 1, 1, 8], strides = [1, 1, 1, 1]} : vector<9x1x1x8xf32> to vector<1x1x1x8xf32>
    %34 = vector.shape_cast %33 : vector<1x1x1x8xf32> to vector<1x1x8xf32>
    %35 = vector.broadcast %34 : vector<1x1x8xf32> to vector<16x16x8xf32>
    %36 = arith.mulf %32, %35 : vector<16x16x8xf32>
    %37 = arith.addf %31, %36 : vector<16x16x8xf32>
    %c1_28 = arith.constant 1 : index
    %c7_29 = arith.constant 7 : index
    %c0_30 = arith.constant 0 : index
    %38 = vector.load %arg6[%c1_28, %c7_29, %c0_30] : memref<18x32x8xf32, #tpu.memory_space<vmem>>, vector<16x16x8xf32>
    %39 = vector.extract_strided_slice %18 {offsets = [3, 0, 0, 0], sizes = [1, 1, 1, 8], strides = [1, 1, 1, 1]} : vector<9x1x1x8xf32> to vector<1x1x1x8xf32>
    %40 = vector.shape_cast %39 : vector<1x1x1x8xf32> to vector<1x1x8xf32>
    %41 = vector.broadcast %40 : vector<1x1x8xf32> to vector<16x16x8xf32>
    %42 = arith.mulf %38, %41 : vector<16x16x8xf32>
    %43 = arith.addf %37, %42 : vector<16x16x8xf32>
    %c1_31 = arith.constant 1 : index
    %c8_32 = arith.constant 8 : index
    %c0_33 = arith.constant 0 : index
    %44 = vector.load %arg6[%c1_31, %c8_32, %c0_33] : memref<18x32x8xf32, #tpu.memory_space<vmem>>, vector<16x16x8xf32>
    %45 = vector.extract_strided_slice %18 {offsets = [4, 0, 0, 0], sizes = [1, 1, 1, 8], strides = [1, 1, 1, 1]} : vector<9x1x1x8xf32> to vector<1x1x1x8xf32>
    %46 = vector.shape_cast %45 : vector<1x1x1x8xf32> to vector<1x1x8xf32>
    %47 = vector.broadcast %46 : vector<1x1x8xf32> to vector<16x16x8xf32>
    %48 = arith.mulf %44, %47 : vector<16x16x8xf32>
    %49 = arith.addf %43, %48 : vector<16x16x8xf32>
    %c1_34 = arith.constant 1 : index
    %c9_35 = arith.constant 9 : index
    %c0_36 = arith.constant 0 : index
    %50 = vector.load %arg6[%c1_34, %c9_35, %c0_36] : memref<18x32x8xf32, #tpu.memory_space<vmem>>, vector<16x16x8xf32>
    %51 = vector.extract_strided_slice %18 {offsets = [5, 0, 0, 0], sizes = [1, 1, 1, 8], strides = [1, 1, 1, 1]} : vector<9x1x1x8xf32> to vector<1x1x1x8xf32>
    %52 = vector.shape_cast %51 : vector<1x1x1x8xf32> to vector<1x1x8xf32>
    %53 = vector.broadcast %52 : vector<1x1x8xf32> to vector<16x16x8xf32>
    %54 = arith.mulf %50, %53 : vector<16x16x8xf32>
    %55 = arith.addf %49, %54 : vector<16x16x8xf32>
    %c2 = arith.constant 2 : index
    %c7_37 = arith.constant 7 : index
    %c0_38 = arith.constant 0 : index
    %56 = vector.load %arg6[%c2, %c7_37, %c0_38] : memref<18x32x8xf32, #tpu.memory_space<vmem>>, vector<16x16x8xf32>
    %57 = vector.extract_strided_slice %18 {offsets = [6, 0, 0, 0], sizes = [1, 1, 1, 8], strides = [1, 1, 1, 1]} : vector<9x1x1x8xf32> to vector<1x1x1x8xf32>
    %58 = vector.shape_cast %57 : vector<1x1x1x8xf32> to vector<1x1x8xf32>
    %59 = vector.broadcast %58 : vector<1x1x8xf32> to vector<16x16x8xf32>
    %60 = arith.mulf %56, %59 : vector<16x16x8xf32>
    %61 = arith.addf %55, %60 : vector<16x16x8xf32>
    %c2_39 = arith.constant 2 : index
    %c8_40 = arith.constant 8 : index
    %c0_41 = arith.constant 0 : index
    %62 = vector.load %arg6[%c2_39, %c8_40, %c0_41] : memref<18x32x8xf32, #tpu.memory_space<vmem>>, vector<16x16x8xf32>
    %63 = vector.extract_strided_slice %18 {offsets = [7, 0, 0, 0], sizes = [1, 1, 1, 8], strides = [1, 1, 1, 1]} : vector<9x1x1x8xf32> to vector<1x1x1x8xf32>
    %64 = vector.shape_cast %63 : vector<1x1x1x8xf32> to vector<1x1x8xf32>
    %65 = vector.broadcast %64 : vector<1x1x8xf32> to vector<16x16x8xf32>
    %66 = arith.mulf %62, %65 : vector<16x16x8xf32>
    %67 = arith.addf %61, %66 : vector<16x16x8xf32>
    %c2_42 = arith.constant 2 : index
    %c9_43 = arith.constant 9 : index
    %c0_44 = arith.constant 0 : index
    %68 = vector.load %arg6[%c2_42, %c9_43, %c0_44] : memref<18x32x8xf32, #tpu.memory_space<vmem>>, vector<16x16x8xf32>
    %69 = vector.extract_strided_slice %18 {offsets = [8, 0, 0, 0], sizes = [1, 1, 1, 8], strides = [1, 1, 1, 1]} : vector<9x1x1x8xf32> to vector<1x1x1x8xf32>
    %70 = vector.shape_cast %69 : vector<1x1x1x8xf32> to vector<1x1x8xf32>
    %71 = vector.broadcast %70 : vector<1x1x8xf32> to vector<16x16x8xf32>
    %72 = arith.mulf %68, %71 : vector<16x16x8xf32>
    %73 = arith.addf %67, %72 : vector<16x16x8xf32>
    %c0_45 = arith.constant 0 : index
    %c0_46 = arith.constant 0 : index
    %c0_47 = arith.constant 0 : index
    %c0_48 = arith.constant 0 : index
    %74 = vector.load %arg5[%c0_45, %c0_46, %c0_47, %c0_48] : memref<1x16x16x8xf32, #tpu.memory_space<vmem>>, vector<1x16x16x8xf32>
    %75 = vector.shape_cast %74 : vector<1x16x16x8xf32> to vector<16x16x8xf32>
    %76 = vector.shape_cast %73 : vector<16x16x8xf32> to vector<1x16x16x8xf32>
    tpu.vector_store %arg5[%c0_45, %c0_46, %c0_47, %c0_48], %76 {strides = array<i32>} : memref<1x16x16x8xf32, #tpu.memory_space<vmem>>, vector<1x16x16x8xf32>,
    return
  }
  func.func @transform_0(%arg0: i32, %arg1: i32) -> (i32, i32, i32, i32) {
    %c0_i32 = arith.constant 0 : i32
    %c0_i32_0 = arith.constant 0 : i32
    %c0_i32_1 = arith.constant 0 : i32
    %c0_i32_2 = arith.constant 0 : i32
    return %arg0, %c0_i32, %c0_i32_0, %c0_i32_1 : i32, i32, i32, i32
  }
  func.func @transform_1(%arg0: i32, %arg1: i32) -> (i32, i32) {
    %c0_i32 = arith.constant 0 : i32
    %c0_i32_0 = arith.constant 0 : i32
    return %c0_i32, %arg1 : i32, i32
  }
  func.func @transform_2(%arg0: i32, %arg1: i32) -> (i32, i32) {
    %c0_i32 = arith.constant 0 : i32
    %c0_i32_0 = arith.constant 0 : i32
    return %c0_i32, %arg1 : i32, i32
  }
  func.func @transform_3(%arg0: i32, %arg1: i32) -> (i32, i32, i32, i32) {
    %c0_i32 = arith.constant 0 : i32
    %c0_i32_0 = arith.constant 0 : i32
    %c0_i32_1 = arith.constant 0 : i32
    return %arg0, %c0_i32, %c0_i32_0, %arg1 : i32, i32, i32, i32
  }
}

</mosaic_0001>

<llo_original>
// kernel: squeeze.3
$region0: #{squeeze.3}
  %s0 = inlined_call_operand.vmem [shape: f32[8,3,3], index: 0, kind: input, shape index: {}]
  %s1 = inlined_call_operand.vmem [shape: f32[8,9], index: 1, kind: output, shape index: {}]
  $region1: #{squeeze.3} parent=0
    #allocation0 [shape = 'u8[12288]{0}', space=vmem, size = 0x3000, scoped, tag = 'scoped mem for input reshape']
    %s3 = sshllo.u32 0, 4
    %s4 = smul.addr 4, 2
    %s5 = scalar_lea.vmem %s0, %s4
    %v6 = vld [vmem:[%s5] sm:%s3]
    %s7 = scalar_lea.vmem [#allocation0], 16
    %8 = vst [vmem:[%s7] sm:%s3] %v6
    %s9 = scalar_lea.vmem %s0, 4
    %v10 = vld [vmem:[%s9] sm:%s3]
    %s11 = scalar_lea.vmem [#allocation0], 8
    %12 = vst [vmem:[%s11] sm:%s3] %v10
    %v13 = vld [vmem:[%s0] sm:%s3]
    %14 = vst [vmem:[#allocation0] sm:%s3] %v13
    %v15 = vld [vmem:[#allocation0] sm:$0x7]
    %vm16 = vcmask 64512
    %17 = vst.msk [vmem:[%s1] sm:$0x7] %vm16, %v15
    %s18 = scalar_lea.vmem [#allocation0], 8
    %v19 = vld [vmem:[%s18] sm:$0x7]
    %vm20 = vcmask 64512
    %s21 = scalar_lea.vmem %s1, 3
    %22 = vst.msk [vmem:[%s21] sm:$0x7] %vm20, %v19
    %s23 = scalar_lea.vmem [#allocation0], 16
    %v24 = vld [vmem:[%s23] sm:$0x7]
    %vm25 = vcmask 64512
    %s26 = scalar_lea.vmem %s1, 6
    %27 = vst.msk [vmem:[%s26] sm:$0x7] %vm25, %v24

// kernel: depthwise_separable_conv2d.1
$region0: #{depthwise_separable_conv2d.1}
  #allocation0 [shape = 'u32[]', space=smem, size = 0x4, offset = 0x4, fixed_abs, tag = 'smem constant byte address 0x4 - core index']
  #allocation1 [shape = 'u32[144,128]{1,0:T(1,128)}', space=vmem, size = 0x12000, scoped, tag = 'internal scratch']
  #allocation2 [shape = 'f32[18,32,8]{2,1,0:T(8,128)}', space=vmem, size = 0x48000, scoped, tag = 'scratch operand']
  %s0 = inlined_call_operand.vmem [shape: f32[2,16,16,4], index: 0, kind: input, shape index: {}]
  %s1 = inlined_call_operand.vmem [shape: f32[4,8], index: 1, kind: input, shape index: {}]
  %s2 = inlined_call_operand.vmem [shape: f32[9,8], index: 2, kind: input, shape index: {}]
  %s3 = inlined_call_operand.vmem [shape: f32[2,16,16,8], index: 3, kind: output, shape index: {}]
  %s4 = sld [smem:[#allocation0]]
  $region45: #{depthwise_separable_conv2d.1} parent=0
    _
  %s6 = ssub.s32 1, %s4
  %s7 = scalar_select 0, %s6, %s4
  loop: start=0, step=1, limit=4
  $region2: #{depthwise_separable_conv2d.1} parent=0 // loop_pre_header
    _
  $region3: #{depthwise_separable_conv2d.1} parent=0 // loop_header
    %s9 = sphi 0, %s13
    %p10 = scmp.ge.s32.totalorder %s9, 4
    %s16 = sphi 0, %s28
    %s17 = sphi 0, %s24
    %s18 = sphi 0, %s16
    %s19 = sphi 0, %s17
    %s20 = sphi 0, %s18
    %s21 = sphi 0, %s19
    %s31 = sphi 0, %s33
    %s34 = sphi 0, %s31
    %s35 = sphi 0, %s34
    %s51 = sphi 0, %s35
    %s57 = sphi 0, %s59
    %s60 = sphi 0, %s57
    %s61 = sphi 0, %s60
    %s77 = sphi 0, %s61
    %s83 = sphi 0, %s85
    %s86 = sphi 0, %s83
    %s87 = sphi 0, %s86
    %s103 = sphi 0, %s87
    %s111 = sphi 0, %s113
    %s114 = sphi 0, %s111
    %s115 = sphi 0, %s114
    %s131 = sphi 0, %s115
  $region4: #{depthwise_separable_conv2d.1} parent=0 // loop_header_branch
    %12 = sbr.rel (%p10) target = $region8
  $region5: #{depthwise_separable_conv2d.1} parent=0 // loop_body
    %s14 = ssub.s32 %s9, 1
    %s15 = ssub.s32 %s9, 2
    %s22 = sadd.s32 1, %s17
    %p23 = scmp.ge.s32.totalorder %s22, 1
    %s24 = scalar_select %p23, 0, %s22
    %s25 = sadd.s32 1, %s16
    %s26 = scalar_select %p23, %s25, %s16
    %p27 = scmp.ge.s32.totalorder %s26, 2
    %s28 = scalar_select %p27, 0, %s26
    %s29 = ssub.s32 %s16, %s28
    %p30 = scmp.eq.s32.totalorder %s29, 0
    %s32 = sadd.s32 %s31, 1
    %s33 = scalar_select %p30, %s31, %s32
    %p36 = pneg %p30
    %p37 = scmp.eq.s32.totalorder %s9, 1
    %p38 = por %p36, %p37
    %p39 = scmp.ne.s32.totalorder %s31, %s34
    %p40 = scmp.eq.s32.totalorder %s9, 0
    %p41 = por %p39, %p40
    %p42 = scmp.ne.s32.totalorder %s31, %s34
    %p43 = scmp.eq.s32.totalorder %s14, 1
    %p44 = por %p42, %p43
    %p45 = scmp.ne.s32.totalorder %s34, %s35
    %p46 = scmp.eq.s32.totalorder %s14, 0
    %p47 = por %p45, %p46
    %p48 = scmp.ne.s32.totalorder %s34, %s35
    %p49 = scmp.eq.s32.totalorder %s15, 1
    %p50 = por %p48, %p49
    %p52 = scmp.ne.s32.totalorder %s35, %s51
    %p53 = scmp.eq.s32.totalorder %s15, 0
    %p54 = por %p52, %p53
    %s55 = ssub.s32 %s17, %s24
    %p56 = scmp.eq.s32.totalorder %s55, 0
    %s58 = sadd.s32 %s57, 1
    %s59 = scalar_select %p56, %s57, %s58
    %p62 = pneg %p56
    %p63 = scmp.eq.s32.totalorder %s9, 1
    %p64 = por %p62, %p63
    %p65 = scmp.ne.s32.totalorder %s57, %s60
    %p66 = scmp.eq.s32.totalorder %s9, 0
    %p67 = por %p65, %p66
    %p68 = scmp.ne.s32.totalorder %s57, %s60
    %p69 = scmp.eq.s32.totalorder %s14, 1
    %p70 = por %p68, %p69
    %p71 = scmp.ne.s32.totalorder %s60, %s61
    %p72 = scmp.eq.s32.totalorder %s14, 0
    %p73 = por %p71, %p72
    %p74 = scmp.ne.s32.totalorder %s60, %s61
    %p75 = scmp.eq.s32.totalorder %s15, 1
    %p76 = por %p74, %p75
    %p78 = scmp.ne.s32.totalorder %s61, %s77
    %p79 = scmp.eq.s32.totalorder %s15, 0
    %p80 = por %p78, %p79
    %s81 = ssub.s32 %s17, %s24
    %p82 = scmp.eq.s32.totalorder %s81, 0
    %s84 = sadd.s32 %s83, 1
    %s85 = scalar_select %p82, %s83, %s84
    %p88 = pneg %p82
    %p89 = scmp.eq.s32.totalorder %s9, 1
    %p90 = por %p88, %p89
    %p91 = scmp.ne.s32.totalorder %s83, %s86
    %p92 = scmp.eq.s32.totalorder %s9, 0
    %p93 = por %p91, %p92
    %p94 = scmp.ne.s32.totalorder %s83, %s86
    %p95 = scmp.eq.s32.totalorder %s14, 1
    %p96 = por %p94, %p95
    %p97 = scmp.ne.s32.totalorder %s86, %s87
    %p98 = scmp.eq.s32.totalorder %s14, 0
    %p99 = por %p97, %p98
    %p100 = scmp.ne.s32.totalorder %s86, %s87
    %p101 = scmp.eq.s32.totalorder %s15, 1
    %p102 = por %p100, %p101
    %p104 = scmp.ne.s32.totalorder %s87, %s103
    %p105 = scmp.eq.s32.totalorder %s15, 0
    %p106 = por %p104, %p105
    %s107 = ssub.s32 %s16, %s28
    %s108 = ssub.s32 %s17, %s24
    %s109 = sor.u32 %s107, %s108
    %p110 = scmp.eq.s32.totalorder %s109, 0
    %s112 = sadd.s32 %s111, 1
    %s113 = scalar_select %p110, %s111, %s112
    %p116 = pneg %p110
    %p117 = scmp.eq.s32.totalorder %s9, 1
    %p118 = por %p116, %p117
    %p119 = scmp.ne.s32.totalorder %s111, %s114
    %p120 = scmp.eq.s32.totalorder %s9, 0
    %p121 = por %p119, %p120
    %p122 = scmp.ne.s32.totalorder %s111, %s114
    %p123 = scmp.eq.s32.totalorder %s14, 1
    %p124 = por %p122, %p123
    %p125 = scmp.ne.s32.totalorder %s114, %s115
    %p126 = scmp.eq.s32.totalorder %s14, 0
    %p127 = por %p125, %p126
    %p128 = scmp.ne.s32.totalorder %s114, %s115
    %p129 = scmp.eq.s32.totalorder %s15, 1
    %p130 = por %p128, %p129
    %p132 = scmp.ne.s32.totalorder %s115, %s131
    %p133 = scmp.eq.s32.totalorder %s15, 0
    %p134 = por %p132, %p133
    %p135 = scmp.le.s32.totalorder 1, %s9
    %p136 = scmp.lt.s32.totalorder %s9, 3
    %p137 = pnand %p135, %p136
    %p138 = pneg %p137
    // Predicated region
    $region9: #{depthwise_separable_conv2d.1} parent=5 // pred_check
      _
    $region10: #{depthwise_separable_conv2d.1} parent=5 // pred_check_branch
      %140 = sbr.rel (%p137) target = $region12
    $region11: #{depthwise_separable_conv2d.1} parent=5 // pred_region
      %s141 = ssub.s32 %s9, 1
      // Predicated region
      $region13: #{depthwise_separable_conv2d.1} parent=11 // pred_check
        %p142 = pneg %p73
      $region14: #{depthwise_separable_conv2d.1} parent=11 // pred_check_branch
        %144 = sbr.rel (%p142) target = $region16
      $region15: #{depthwise_separable_conv2d.1} parent=11 // pred_region
        %p145 = scmp.lt.s32.totalorder %s19, 0
        %s146 = scalar_select %p145, %s19, 0
        %s147 = smul.addr %s146, 4
        %s148 = scalar_lea.vmem %s1, %s147
      $region16: #{depthwise_separable_conv2d.1} parent=11 // pred_fallthru
        _
      // Predicated region
      $region17: #{depthwise_separable_conv2d.1} parent=11 // pred_check
        %p149 = pneg %p99
      $region18: #{depthwise_separable_conv2d.1} parent=11 // pred_check_branch
        %151 = sbr.rel (%p149) target = $region20
      $region19: #{depthwise_separable_conv2d.1} parent=11 // pred_region
        %p152 = scmp.lt.s32.totalorder %s19, 0
        %s153 = scalar_select %p152, %s19, 0
        %s154 = smul.addr %s153, 8
        %s155 = scalar_lea.vmem %s2, %s154
      $region20: #{depthwise_separable_conv2d.1} parent=11 // pred_fallthru
        _
    $region12: #{depthwise_separable_conv2d.1} parent=5 // pred_fallthru
      _
    %p156 = scmp.lt.s32.totalorder %s9, 2
    // Predicated region
    $region21: #{depthwise_separable_conv2d.1} parent=5 // pred_check
      %p157 = pneg %p156
    $region22: #{depthwise_separable_conv2d.1} parent=5 // pred_check_branch
      %159 = sbr.rel (%p157) target = $region24
    $region23: #{depthwise_separable_conv2d.1} parent=5 // pred_region
      // Predicated region
      $region25: #{depthwise_separable_conv2d.1} parent=23 // pred_check
        %p160 = pneg %p41
      $region26: #{depthwise_separable_conv2d.1} parent=23 // pred_check_branch
        %162 = sbr.rel (%p160) target = $region28
      $region27: #{depthwise_separable_conv2d.1} parent=23 // pred_region
        %p163 = scmp.lt.s32.totalorder %s16, 1
        %s164 = scalar_select %p163, %s16, 1
        %s165 = smul.addr %s164, 32
        %s166 = smul.addr %s165, 8
        %s167 = scalar_lea.vmem %s0, %s166
      $region28: #{depthwise_separable_conv2d.1} parent=23 // pred_fallthru
        _
    $region24: #{depthwise_separable_conv2d.1} parent=5 // pred_fallthru
      _
    %p168 = scmp.le.s32.totalorder 1, %s9
    %p169 = scmp.lt.s32.totalorder %s9, 3
    %p170 = pnand %p168, %p169
    %p171 = pneg %p170
    // Predicated region
    $region29: #{depthwise_separable_conv2d.1} parent=5 // pred_check
      _
    $region30: #{depthwise_separable_conv2d.1} parent=5 // pred_check_branch
      %173 = sbr.rel (%p170) target = $region32
    $region31: #{depthwise_separable_conv2d.1} parent=5 // pred_region
      %s174 = ssub.s32 %s9, 1
      %p175 = scmp.lt.s32.totalorder %s18, 1
      %s176 = scalar_select %p175, %s18, 1
      %s177 = smul.addr %s176, 32
      %s178 = smul.addr %s177, 8
      %s179 = scalar_lea.vmem %s0, %s178
      %p180 = pneg %p47
      %p181 = pneg %p44
      %p182 = scmp.lt.s32.totalorder %s19, 0
      %s183 = scalar_select %p182, %s19, 0
      %s184 = smul.addr %s183, 4
      %s185 = scalar_lea.vmem %s1, %s184
      %p186 = pneg %p73
      %p187 = pneg %p70
      %p188 = scmp.lt.s32.totalorder %s19, 0
      %s189 = scalar_select %p188, %s19, 0
      %s190 = smul.addr %s189, 8
      %s191 = scalar_lea.vmem %s2, %s190
      %p192 = pneg %p99
      %p193 = pneg %p96
      %p194 = pneg %p127
      %p195 = pneg %p124
      %p196 = scmp.lt.s32.totalorder %s18, 1
      %s197 = scalar_select %p196, %s18, 1
      %p198 = scmp.lt.s32.totalorder %s19, 0
      %s199 = scalar_select %p198, %s19, 0
      %s200 = smul.addr %s197, 32
      %s201 = sadd.s32 %s199, %s200
      %s202 = smul.addr %s201, 8
      %s203 = scalar_lea.vmem %s3, %s202
      %p204 = scmp.lt.s32.totalorder %s18, 1
      %s205 = scalar_select %p204, %s18, 1
      %s206 = smul.addr %s205, 32
      %s207 = smul.addr %s206, 8
      %s208 = scalar_lea.vmem %s0, %s207
      %p209 = scmp.lt.s32.totalorder %s19, 0
      %s210 = scalar_select %p209, %s19, 0
      %s211 = smul.addr %s210, 4
      %s212 = scalar_lea.vmem %s1, %s211
      %p213 = scmp.lt.s32.totalorder %s19, 0
      %s214 = scalar_select %p213, %s19, 0
      %s215 = smul.addr %s214, 8
      %s216 = scalar_lea.vmem %s2, %s215
      %p217 = scmp.lt.s32.totalorder %s18, 1
      %s218 = scalar_select %p217, %s18, 1
      %p219 = scmp.lt.s32.totalorder %s19, 0
      %s220 = scalar_select %p219, %s19, 0
      %s221 = smul.addr %s218, 32
      %s222 = sadd.s32 %s220, %s221
      %s223 = smul.addr %s222, 8
      %s224 = scalar_lea.vmem %s3, %s223
      %vm225 = vcmask 64512
      %226 = vst.msk [vmem:[#allocation2] sm:$0xff] %vm225, 0.0
      %227 = vst.msk [vmem:[#allocation2 + $0x8] sm:$0xff] %vm225, 0.0
      %228 = vst.msk [vmem:[#allocation2 + $0x10] sm:$0xff] %vm225, 0.0
      %229 = vst.msk [vmem:[#allocation2 + $0x18] sm:$0xff] %vm225, 0.0
      %s230 = scalar_lea.vmem [#allocation2], 544
      %231 = vst.msk [vmem:[%s230] sm:$0xff] %vm225, 0.0
      %232 = vst.msk [vmem:[%s230 + $0x8] sm:$0xff] %vm225, 0.0
      %233 = vst.msk [vmem:[%s230 + $0x10] sm:$0xff] %vm225, 0.0
      %234 = vst.msk [vmem:[%s230 + $0x18] sm:$0xff] %vm225, 0.0
      %s235 = scalar_lea.vmem [#allocation2], 32
      %236 = vst.msk [vmem:[%s235] sm:$0xff] %vm225, 0.0
      %237 = vst.msk [vmem:[%s235 + $0x20] sm:$0xff] %vm225, 0.0
      %238 = vst.msk [vmem:[%s235 + $0x40] sm:$0xff] %vm225, 0.0
      %239 = vst.msk [vmem:[%s235 + $0x60] sm:$0xff] %vm225, 0.0
      %240 = vst.msk [vmem:[%s235 + $0x80] sm:$0xff] %vm225, 0.0
      %241 = vst.msk [vmem:[%s235 + $0xa0] sm:$0xff] %vm225, 0.0
      %242 = vst.msk [vmem:[%s235 + $0xc0] sm:$0xff] %vm225, 0.0
      %243 = vst.msk [vmem:[%s235 + $0xe0] sm:$0xff] %vm225, 0.0
      %244 = vst.msk [vmem:[%s235 + $0x100] sm:$0xff] %vm225, 0.0
      %245 = vst.msk [vmem:[%s235 + $0x120] sm:$0xff] %vm225, 0.0
      %246 = vst.msk [vmem:[%s235 + $0x140] sm:$0xff] %vm225, 0.0
      %247 = vst.msk [vmem:[%s235 + $0x160] sm:$0xff] %vm225, 0.0
      %248 = vst.msk [vmem:[%s235 + $0x180] sm:$0xff] %vm225, 0.0
      %249 = vst.msk [vmem:[%s235 + $0x1a0] sm:$0xff] %vm225, 0.0
      %250 = vst.msk [vmem:[%s235 + $0x1c0] sm:$0xff] %vm225, 0.0
      %251 = vst.msk [vmem:[%s235 + $0x1e0] sm:$0xff] %vm225, 0.0
      %252 = vst.msk [vmem:[%s235 + $0x18] sm:$0xff] %vm225, 0.0
      %253 = vst.msk [vmem:[%s235 + $0x38] sm:$0xff] %vm225, 0.0
      %254 = vst.msk [vmem:[%s235 + $0x58] sm:$0xff] %vm225, 0.0
      %255 = vst.msk [vmem:[%s235 + $0x78] sm:$0xff] %vm225, 0.0
      %256 = vst.msk [vmem:[%s235 + $0x98] sm:$0xff] %vm225, 0.0
      %257 = vst.msk [vmem:[%s235 + $0xb8] sm:$0xff] %vm225, 0.0
      %258 = vst.msk [vmem:[%s235 + $0xd8] sm:$0xff] %vm225, 0.0
      %259 = vst.msk [vmem:[%s235 + $0xf8] sm:$0xff] %vm225, 0.0
      %260 = vst.msk [vmem:[%s235 + $0x118] sm:$0xff] %vm225, 0.0
      %261 = vst.msk [vmem:[%s235 + $0x138] sm:$0xff] %vm225, 0.0
      %262 = vst.msk [vmem:[%s235 + $0x158] sm:$0xff] %vm225, 0.0
      %263 = vst.msk [vmem:[%s235 + $0x178] sm:$0xff] %vm225, 0.0
      %264 = vst.msk [vmem:[%s235 + $0x198] sm:$0xff] %vm225, 0.0
      %265 = vst.msk [vmem:[%s235 + $0x1b8] sm:$0xff] %vm225, 0.0
      %266 = vst.msk [vmem:[%s235 + $0x1d8] sm:$0xff] %vm225, 0.0
      %267 = vst.msk [vmem:[%s235 + $0x1f8] sm:$0xff] %vm225, 0.0
      %v268 = vld [vmem:[%s208] sm:$0xff]
      %v269 = vld [vmem:[%s208 + $0x8] sm:$0xff]
      %v270 = vld [vmem:[%s208 + $0x10] sm:$0xff]
      %v271 = vld [vmem:[%s208 + $0x18] sm:$0xff]
      %v272 = vld [vmem:[%s208 + $0x20] sm:$0xff]
      %v273 = vld [vmem:[%s208 + $0x28] sm:$0xff]
      %v274 = vld [vmem:[%s208 + $0x30] sm:$0xff]
      %v275 = vld [vmem:[%s208 + $0x38] sm:$0xff]
      %v276 = vld [vmem:[%s208 + $0x40] sm:$0xff]
      %v277 = vld [vmem:[%s208 + $0x48] sm:$0xff]
      %v278 = vld [vmem:[%s208 + $0x50] sm:$0xff]
      %v279 = vld [vmem:[%s208 + $0x58] sm:$0xff]
      %v280 = vld [vmem:[%s208 + $0x60] sm:$0xff]
      %v281 = vld [vmem:[%s208 + $0x68] sm:$0xff]
      %v282 = vld [vmem:[%s208 + $0x70] sm:$0xff]
      %v283 = vld [vmem:[%s208 + $0x78] sm:$0xff]
      %v284 = vld [vmem:[%s208 + $0x80] sm:$0xff]
      %v285 = vld [vmem:[%s208 + $0x88] sm:$0xff]
      %v286 = vld [vmem:[%s208 + $0x90] sm:$0xff]
      %v287 = vld [vmem:[%s208 + $0x98] sm:$0xff]
      %v288 = vld [vmem:[%s208 + $0xa0] sm:$0xff]
      %v289 = vld [vmem:[%s208 + $0xa8] sm:$0xff]
      %v290 = vld [vmem:[%s208 + $0xb0] sm:$0xff]
      %v291 = vld [vmem:[%s208 + $0xb8] sm:$0xff]
      %v292 = vld [vmem:[%s208 + $0xc0] sm:$0xff]
      %v293 = vld [vmem:[%s208 + $0xc8] sm:$0xff]
      %v294 = vld [vmem:[%s208 + $0xd0] sm:$0xff]
      %v295 = vld [vmem:[%s208 + $0xd8] sm:$0xff]
      %v296 = vld [vmem:[%s208 + $0xe0] sm:$0xff]
      %v297 = vld [vmem:[%s208 + $0xe8] sm:$0xff]
      %v298 = vld [vmem:[%s208 + $0xf0] sm:$0xff]
      %v299 = vld [vmem:[%s208 + $0xf8] sm:$0xff]
      %v300 = vld [vmem:[%s212] sm:$0xf]
      %vm301 = vcmask 31744
      %v303 = vsel %vm301, %v268, 0
      %v306 = vsel %vm301, %v269, 0
      %v309 = vsel %vm301, %v270, 0
      %v312 = vsel %vm301, %v271, 0
      %v315 = vsel %vm301, %v272, 0
      %v318 = vsel %vm301, %v273, 0
      %v321 = vsel %vm301, %v274, 0
      %v324 = vsel %vm301, %v275, 0
      %v327 = vsel %vm301, %v276, 0
      %v330 = vsel %vm301, %v277, 0
      %v333 = vsel %vm301, %v278, 0
      %v336 = vsel %vm301, %v279, 0
      %v339 = vsel %vm301, %v280, 0
      %v342 = vsel %vm301, %v281, 0
      %v345 = vsel %vm301, %v282, 0
      %v348 = vsel %vm301, %v283, 0
      %v351 = vsel %vm301, %v284, 0
      %v354 = vsel %vm301, %v285, 0
      %v357 = vsel %vm301, %v286, 0
      %v360 = vsel %vm301, %v287, 0
      %v363 = vsel %vm301, %v288, 0
      %v366 = vsel %vm301, %v289, 0
      %v369 = vsel %vm301, %v290, 0
      %v372 = vsel %vm301, %v291, 0
      %v375 = vsel %vm301, %v292, 0
      %v378 = vsel %vm301, %v293, 0
      %v381 = vsel %vm301, %v294, 0
      %v384 = vsel %vm301, %v295, 0
      %v387 = vsel %vm301, %v296, 0
      %v390 = vsel %vm301, %v297, 0
      %v393 = vsel %vm301, %v298, 0
      %v396 = vsel %vm301, %v299, 0
      %vm398 = vcmask 1043456
      %v400 = vsel %vm398, %v300, 0
      %402 = vmatprep.subr.mxu0 0.0
      %403 = vmatpush1.msra.mxu0 %v400
      %404 = vmatprep.subr.mxu0 0.0
      %405 = vmatpush1.msra.mxu0 0.0
      %406 = vmatprep.subr.mxu0 0.0
      %407 = vmatpush1.msra.mxu0 0.0
      %408 = vmatprep.subr.mxu0 0.0
      %409 = vmatpush1.msra.mxu0 0.0
      %410 = vmatprep.subr.mxu0 0.0
      %411 = vmatpush1.msra.mxu0 0.0
      %412 = vmatprep.subr.mxu0 0.0
      %413 = vmatpush1.msra.mxu0 0.0
      %414 = vmatprep.subr.mxu0 0.0
      %415 = vmatpush1.msra.mxu0 0.0
      %416 = vmatprep.subr.mxu0 0.0
      %417 = vmatpush1.msra.mxu0 0.0
      %418 = vmatprep.subr.mxu0 0.0
      %419 = vmatpush1.msra.mxu0 0.0
      %420 = vmatprep.subr.mxu0 0.0
      %421 = vmatpush1.msra.mxu0 0.0
      %422 = vmatprep.subr.mxu0 0.0
      %423 = vmatpush1.msra.mxu0 0.0
      %424 = vmatprep.subr.mxu0 0.0
      %425 = vmatpush1.msra.mxu0 0.0
      %426 = vmatprep.subr.mxu0 0.0
      %427 = vmatpush1.msra.mxu0 0.0
      %428 = vmatprep.subr.mxu0 0.0
      %429 = vmatpush1.msra.mxu0 0.0
      %430 = vmatprep.subr.mxu0 0.0
      %431 = vmatpush1.msra.mxu0 0.0
      %432 = vmatprep.subr.mxu0 0.0
      %433 = vmatpush1.msra.mxu0 0.0
      %434 = vmatprep.subr.mxu0 0.0
      %435 = vmatpush1.msra.mxu0 0.0
      %436 = vmatprep.subr.mxu0 0.0
      %437 = vmatpush1.msra.mxu0 0.0
      %438 = vmatprep.subr.mxu0 0.0
      %439 = vmatpush1.msra.mxu0 0.0
      %440 = vmatprep.subr.mxu0 0.0
      %441 = vmatpush1.msra.mxu0 0.0
      %442 = vmatprep.subr.mxu0 0.0
      %443 = vmatpush1.msra.mxu0 0.0
      %444 = vmatprep.subr.mxu0 0.0
      %445 = vmatpush1.msra.mxu0 0.0
      %446 = vmatprep.subr.mxu0 0.0
      %447 = vmatpush1.msra.mxu0 0.0
      %448 = vmatprep.subr.mxu0 0.0
      %449 = vmatpush1.msra.mxu0 0.0
      %450 = vmatprep.subr.mxu0 0.0
      %451 = vmatpush1.msra.mxu0 0.0
      %452 = vmatprep.subr.mxu0 0.0
      %453 = vmatpush1.msra.mxu0 0.0
      %454 = vmatprep.subr.mxu0 0.0
      %455 = vmatpush1.msra.mxu0 0.0
      %456 = vmatprep.subr.mxu0 0.0
      %457 = vmatpush1.msra.mxu0 0.0
      %458 = vmatprep.subr.mxu0 0.0
      %459 = vmatpush1.msra.mxu0 0.0
      %460 = vmatprep.subr.mxu0 0.0
      %461 = vmatpush1.msra.mxu0 0.0
      %462 = vmatprep.subr.mxu0 0.0
      %463 = vmatpush1.msra.mxu0 0.0
      %464 = vmatprep.subr.mxu0 0.0
      %465 = vmatpush1.msra.mxu0 0.0
      %466 = vmatprep.mubr.f32.mxu0 0.0
      %467 = vmatmul.mubr.f32.gmra.mrb[0].mxu0 %v303
      %v468 = vpop.f32.mrb[0].mxu0
      %v469 = vadd.f32 0.0, %v468
      %v470 = vpop.f32.mrb[0].mxu0
      %471 = vmatprep.mubr.f32.mxu0 0.0
      %472 = vmatmul.mubr.f32.gmra.mrb[0].mxu0 %v306
      %v473 = vpop.f32.mrb[0].mxu0
      %v474 = vadd.f32 0.0, %v473
      %v475 = vpop.f32.mrb[0].mxu0
      %476 = vmatprep.mubr.f32.mxu0 0.0
      %477 = vmatmul.mubr.f32.gmra.mrb[0].mxu0 %v309
      %v478 = vpop.f32.mrb[0].mxu0
      %v479 = vadd.f32 0.0, %v478
      %v480 = vpop.f32.mrb[0].mxu0
      %481 = vmatprep.mubr.f32.mxu0 0.0
      %482 = vmatmul.mubr.f32.gmra.mrb[0].mxu0 %v312
      %v483 = vpop.f32.mrb[0].mxu0
      %v484 = vadd.f32 0.0, %v483
      %v485 = vpop.f32.mrb[0].mxu0
      %486 = vmatprep.mubr.f32.mxu0 0.0
      %487 = vmatmul.mubr.f32.gmra.mrb[0].mxu0 %v315
      %v488 = vpop.f32.mrb[0].mxu0
      %v489 = vadd.f32 0.0, %v488
      %v490 = vpop.f32.mrb[0].mxu0
      %491 = vmatprep.mubr.f32.mxu0 0.0
      %492 = vmatmul.mubr.f32.gmra.mrb[0].mxu0 %v318
      %v493 = vpop.f32.mrb[0].mxu0
      %v494 = vadd.f32 0.0, %v493
      %v495 = vpop.f32.mrb[0].mxu0
      %496 = vmatprep.mubr.f32.mxu0 0.0
      %497 = vmatmul.mubr.f32.gmra.mrb[0].mxu0 %v321
      %v498 = vpop.f32.mrb[0].mxu0
      %v499 = vadd.f32 0.0, %v498
      %v500 = vpop.f32.mrb[0].mxu0
      %501 = vmatprep.mubr.f32.mxu0 0.0
      %502 = vmatmul.mubr.f32.gmra.mrb[0].mxu0 %v324
      %v503 = vpop.f32.mrb[0].mxu0
      %v504 = vadd.f32 0.0, %v503
      %v505 = vpop.f32.mrb[0].mxu0
      %506 = vmatprep.mubr.f32.mxu0 0.0
      %507 = vmatmul.mubr.f32.gmra.mrb[0].mxu0 %v327
      %v508 = vpop.f32.mrb[0].mxu0
      %v509 = vadd.f32 0.0, %v508
      %v510 = vpop.f32.mrb[0].mxu0
      %511 = vmatprep.mubr.f32.mxu0 0.0
      %512 = vmatmul.mubr.f32.gmra.mrb[0].mxu0 %v330
      %v513 = vpop.f32.mrb[0].mxu0
      %v514 = vadd.f32 0.0, %v513
      %v515 = vpop.f32.mrb[0].mxu0
      %516 = vmatprep.mubr.f32.mxu0 0.0
      %517 = vmatmul.mubr.f32.gmra.mrb[0].mxu0 %v333
      %v518 = vpop.f32.mrb[0].mxu0
      %v519 = vadd.f32 0.0, %v518
      %v520 = vpop.f32.mrb[0].mxu0
      %521 = vmatprep.mubr.f32.mxu0 0.0
      %522 = vmatmul.mubr.f32.gmra.mrb[0].mxu0 %v336
      %v523 = vpop.f32.mrb[0].mxu0
      %v524 = vadd.f32 0.0, %v523
      %v525 = vpop.f32.mrb[0].mxu0
      %526 = vmatprep.mubr.f32.mxu0 0.0
      %527 = vmatmul.mubr.f32.gmra.mrb[0].mxu0 %v339
      %v528 = vpop.f32.mrb[0].mxu0
      %v529 = vadd.f32 0.0, %v528
      %v530 = vpop.f32.mrb[0].mxu0
      %531 = vmatprep.mubr.f32.mxu0 0.0
      %532 = vmatmul.mubr.f32.gmra.mrb[0].mxu0 %v342
      %v533 = vpop.f32.mrb[0].mxu0
      %v534 = vadd.f32 0.0, %v533
      %v535 = vpop.f32.mrb[0].mxu0
      %536 = vmatprep.mubr.f32.mxu0 0.0
      %537 = vmatmul.mubr.f32.gmra.mrb[0].mxu0 %v345
      %v538 = vpop.f32.mrb[0].mxu0
      %v539 = vadd.f32 0.0, %v538
      %v540 = vpop.f32.mrb[0].mxu0
      %541 = vmatprep.mubr.f32.mxu0 0.0
      %542 = vmatmul.mubr.f32.gmra.mrb[0].mxu0 %v348
      %v543 = vpop.f32.mrb[0].mxu0
      %v544 = vadd.f32 0.0, %v543
      %v545 = vpop.f32.mrb[0].mxu0
      %546 = vmatprep.mubr.f32.mxu0 0.0
      %547 = vmatmul.mubr.f32.gmra.mrb[0].mxu0 %v351
      %v548 = vpop.f32.mrb[0].mxu0
      %v549 = vadd.f32 0.0, %v548
      %v550 = vpop.f32.mrb[0].mxu0
      %551 = vmatprep.mubr.f32.mxu0 0.0
      %552 = vmatmul.mubr.f32.gmra.mrb[0].mxu0 %v354
      %v553 = vpop.f32.mrb[0].mxu0
      %v554 = vadd.f32 0.0, %v553
      %v555 = vpop.f32.mrb[0].mxu0
      %556 = vmatprep.mubr.f32.mxu0 0.0
      %557 = vmatmul.mubr.f32.gmra.mrb[0].mxu0 %v357
      %v558 = vpop.f32.mrb[0].mxu0
      %v559 = vadd.f32 0.0, %v558
      %v560 = vpop.f32.mrb[0].mxu0
      %561 = vmatprep.mubr.f32.mxu0 0.0
      %562 = vmatmul.mubr.f32.gmra.mrb[0].mxu0 %v360
      %v563 = vpop.f32.mrb[0].mxu0
      %v564 = vadd.f32 0.0, %v563
      %v565 = vpop.f32.mrb[0].mxu0
      %566 = vmatprep.mubr.f32.mxu0 0.0
      %567 = vmatmul.mubr.f32.gmra.mrb[0].mxu0 %v363
      %v568 = vpop.f32.mrb[0].mxu0
      %v569 = vadd.f32 0.0, %v568
      %v570 = vpop.f32.mrb[0].mxu0
      %571 = vmatprep.mubr.f32.mxu0 0.0
      %572 = vmatmul.mubr.f32.gmra.mrb[0].mxu0 %v366
      %v573 = vpop.f32.mrb[0].mxu0
      %v574 = vadd.f32 0.0, %v573
      %v575 = vpop.f32.mrb[0].mxu0
      %576 = vmatprep.mubr.f32.mxu0 0.0
      %577 = vmatmul.mubr.f32.gmra.mrb[0].mxu0 %v369
      %v578 = vpop.f32.mrb[0].mxu0
      %v579 = vadd.f32 0.0, %v578
      %v580 = vpop.f32.mrb[0].mxu0
      %581 = vmatprep.mubr.f32.mxu0 0.0
      %582 = vmatmul.mubr.f32.gmra.mrb[0].mxu0 %v372
      %v583 = vpop.f32.mrb[0].mxu0
      %v584 = vadd.f32 0.0, %v583
      %v585 = vpop.f32.mrb[0].mxu0
      %586 = vmatprep.mubr.f32.mxu0 0.0
      %587 = vmatmul.mubr.f32.gmra.mrb[0].mxu0 %v375
      %v588 = vpop.f32.mrb[0].mxu0
      %v589 = vadd.f32 0.0, %v588
      %v590 = vpop.f32.mrb[0].mxu0
      %591 = vmatprep.mubr.f32.mxu0 0.0
      %592 = vmatmul.mubr.f32.gmra.mrb[0].mxu0 %v378
      %v593 = vpop.f32.mrb[0].mxu0
      %v594 = vadd.f32 0.0, %v593
      %v595 = vpop.f32.mrb[0].mxu0
      %596 = vmatprep.mubr.f32.mxu0 0.0
      %597 = vmatmul.mubr.f32.gmra.mrb[0].mxu0 %v381
      %v598 = vpop.f32.mrb[0].mxu0
      %v599 = vadd.f32 0.0, %v598
      %v600 = vpop.f32.mrb[0].mxu0
      %601 = vmatprep.mubr.f32.mxu0 0.0
      %602 = vmatmul.mubr.f32.gmra.mrb[0].mxu0 %v384
      %v603 = vpop.f32.mrb[0].mxu0
      %v604 = vadd.f32 0.0, %v603
      %v605 = vpop.f32.mrb[0].mxu0
      %606 = vmatprep.mubr.f32.mxu0 0.0
      %607 = vmatmul.mubr.f32.gmra.mrb[0].mxu0 %v387
      %v608 = vpop.f32.mrb[0].mxu0
      %v609 = vadd.f32 0.0, %v608
      %v610 = vpop.f32.mrb[0].mxu0
      %611 = vmatprep.mubr.f32.mxu0 0.0
      %612 = vmatmul.mubr.f32.gmra.mrb[0].mxu0 %v390
      %v613 = vpop.f32.mrb[0].mxu0
      %v614 = vadd.f32 0.0, %v613
      %v615 = vpop.f32.mrb[0].mxu0
      %616 = vmatprep.mubr.f32.mxu0 0.0
      %617 = vmatmul.mubr.f32.gmra.mrb[0].mxu0 %v393
      %v618 = vpop.f32.mrb[0].mxu0
      %v619 = vadd.f32 0.0, %v618
      %v620 = vpop.f32.mrb[0].mxu0
      %621 = vmatprep.mubr.f32.mxu0 0.0
      %622 = vmatmul.mubr.f32.gmra.mrb[0].mxu0 %v396
      %v623 = vpop.f32.mrb[0].mxu0
      %v624 = vadd.f32 0.0, %v623
      %v625 = vpop.f32.mrb[0].mxu0
      %626 = vdwg.mxu0
      %627 = vst.msk [vmem:[%s235 + $0x8] sm:$0xff] %vm225, %v469
      %628 = vst.msk [vmem:[%s235 + $0x10] sm:$0xff] %vm225, %v474
      %629 = vst.msk [vmem:[%s235 + $0x28] sm:$0xff] %vm225, %v479
      %630 = vst.msk [vmem:[%s235 + $0x30] sm:$0xff] %vm225, %v484
      %631 = vst.msk [vmem:[%s235 + $0x48] sm:$0xff] %vm225, %v489
      %632 = vst.msk [vmem:[%s235 + $0x50] sm:$0xff] %vm225, %v494
      %633 = vst.msk [vmem:[%s235 + $0x68] sm:$0xff] %vm225, %v499
      %634 = vst.msk [vmem:[%s235 + $0x70] sm:$0xff] %vm225, %v504
      %635 = vst.msk [vmem:[%s235 + $0x88] sm:$0xff] %vm225, %v509
      %636 = vst.msk [vmem:[%s235 + $0x90] sm:$0xff] %vm225, %v514
      %637 = vst.msk [vmem:[%s235 + $0xa8] sm:$0xff] %vm225, %v519
      %638 = vst.msk [vmem:[%s235 + $0xb0] sm:$0xff] %vm225, %v524
      %639 = vst.msk [vmem:[%s235 + $0xc8] sm:$0xff] %vm225, %v529
      %640 = vst.msk [vmem:[%s235 + $0xd0] sm:$0xff] %vm225, %v534
      %641 = vst.msk [vmem:[%s235 + $0xe8] sm:$0xff] %vm225, %v539
      %642 = vst.msk [vmem:[%s235 + $0xf0] sm:$0xff] %vm225, %v544
      %643 = vst.msk [vmem:[%s235 + $0x108] sm:$0xff] %vm225, %v549
      %644 = vst.msk [vmem:[%s235 + $0x110] sm:$0xff] %vm225, %v554
      %645 = vst.msk [vmem:[%s235 + $0x128] sm:$0xff] %vm225, %v559
      %646 = vst.msk [vmem:[%s235 + $0x130] sm:$0xff] %vm225, %v564
      %647 = vst.msk [vmem:[%s235 + $0x148] sm:$0xff] %vm225, %v569
      %648 = vst.msk [vmem:[%s235 + $0x150] sm:$0xff] %vm225, %v574
      %649 = vst.msk [vmem:[%s235 + $0x168] sm:$0xff] %vm225, %v579
      %650 = vst.msk [vmem:[%s235 + $0x170] sm:$0xff] %vm225, %v584
      %651 = vst.msk [vmem:[%s235 + $0x188] sm:$0xff] %vm225, %v589
      %652 = vst.msk [vmem:[%s235 + $0x190] sm:$0xff] %vm225, %v594
      %653 = vst.msk [vmem:[%s235 + $0x1a8] sm:$0xff] %vm225, %v599
      %654 = vst.msk [vmem:[%s235 + $0x1b0] sm:$0xff] %vm225, %v604
      %655 = vst.msk [vmem:[%s235 + $0x1c8] sm:$0xff] %vm225, %v609
      %656 = vst.msk [vmem:[%s235 + $0x1d0] sm:$0xff] %vm225, %v614
      %657 = vst.msk [vmem:[%s235 + $0x1e8] sm:$0xff] %vm225, %v619
      %658 = vst.msk [vmem:[%s235 + $0x1f0] sm:$0xff] %vm225, %v624
      %v659 = vld [vmem:[%s216] sm:$0xff]
      %v660 = vld [vmem:[%s216 + $0x8] sm:$0x1]
      %v661 = vld [vmem:[#allocation2 + $0x7] sm:$0xff]
      %v662 = vld [vmem:[#allocation2 + $0xf] sm:$0xff]
      %v663 = vld [vmem:[#allocation2 + $0x27] sm:$0xff]
      %v664 = vld [vmem:[#allocation2 + $0x2f] sm:$0xff]
      %v665 = vld [vmem:[#allocation2 + $0x47] sm:$0xff]
      %v666 = vld [vmem:[#allocation2 + $0x4f] sm:$0xff]
      %v667 = vld [vmem:[#allocation2 + $0x67] sm:$0xff]
      %v668 = vld [vmem:[#allocation2 + $0x6f] sm:$0xff]
      %v669 = vld [vmem:[#allocation2 + $0x87] sm:$0xff]
      %v670 = vld [vmem:[#allocation2 + $0x8f] sm:$0xff]
      %v671 = vld [vmem:[#allocation2 + $0xa7] sm:$0xff]
      %v672 = vld [vmem:[#allocation2 + $0xaf] sm:$0xff]
      %v673 = vld [vmem:[#allocation2 + $0xc7] sm:$0xff]
      %v674 = vld [vmem:[#allocation2 + $0xcf] sm:$0xff]
      %v675 = vld [vmem:[#allocation2 + $0xe7] sm:$0xff]
      %v676 = vld [vmem:[#allocation2 + $0xef] sm:$0xff]
      %v677 = vld [vmem:[#allocation2 + $0x107] sm:$0xff]
      %v678 = vld [vmem:[#allocation2 + $0x10f] sm:$0xff]
      %v679 = vld [vmem:[#allocation2 + $0x127] sm:$0xff]
      %v680 = vld [vmem:[#allocation2 + $0x12f] sm:$0xff]
      %v681 = vld [vmem:[#allocation2 + $0x147] sm:$0xff]
      %v682 = vld [vmem:[#allocation2 + $0x14f] sm:$0xff]
      %v683 = vld [vmem:[#allocation2 + $0x167] sm:$0xff]
      %v684 = vld [vmem:[#allocation2 + $0x16f] sm:$0xff]
      %v685 = vld [vmem:[#allocation2 + $0x187] sm:$0xff]
      %v686 = vld [vmem:[#allocation2 + $0x18f] sm:$0xff]
      %v687 = vld [vmem:[#allocation2 + $0x1a7] sm:$0xff]
      %v688 = vld [vmem:[#allocation2 + $0x1af] sm:$0xff]
      %v689 = vld [vmem:[#allocation2 + $0x1c7] sm:$0xff]
      %v690 = vld [vmem:[#allocation2 + $0x1cf] sm:$0xff]
      %v691 = vld [vmem:[#allocation2 + $0x1e7] sm:$0xff]
      %v692 = vld [vmem:[#allocation2 + $0x1ef] sm:$0xff]
      %v693 = vlaneseq
      %v694 = vshrl.u32 %v693, 7
      %v695 = vsub.s32 0, %v694
      %v696 = vrot.slane %v659, %v695
      %v697 = vmul.f32 %v661, %v696
      %v698 = vmul.f32 %v662, %v696
      %v699 = vmul.f32 %v663, %v696
      %v700 = vmul.f32 %v664, %v696
      %v701 = vmul.f32 %v665, %v696
      %v702 = vmul.f32 %v666, %v696
      %v703 = vmul.f32 %v667, %v696
      %v704 = vmul.f32 %v668, %v696
      %v705 = vmul.f32 %v669, %v696
      %v706 = vmul.f32 %v670, %v696
      %v707 = vmul.f32 %v671, %v696
      %v708 = vmul.f32 %v672, %v696
      %v709 = vmul.f32 %v673, %v696
      %v710 = vmul.f32 %v674, %v696
      %v711 = vmul.f32 %v675, %v696
      %v712 = vmul.f32 %v676, %v696
      %v713 = vmul.f32 %v677, %v696
      %v714 = vmul.f32 %v678, %v696
      %v715 = vmul.f32 %v679, %v696
      %v716 = vmul.f32 %v680, %v696
      %v717 = vmul.f32 %v681, %v696
      %v718 = vmul.f32 %v682, %v696
      %v719 = vmul.f32 %v683, %v696
      %v720 = vmul.f32 %v684, %v696
      %v721 = vmul.f32 %v685, %v696
      %v722 = vmul.f32 %v686, %v696
      %v723 = vmul.f32 %v687, %v696
      %v724 = vmul.f32 %v688, %v696
      %v725 = vmul.f32 %v689, %v696
      %v726 = vmul.f32 %v690, %v696
      %v727 = vmul.f32 %v691, %v696
      %v728 = vmul.f32 %v692, %v696
      %v729 = vadd.f32 %v697, 0.0
      %v730 = vadd.f32 %v698, 0.0
      %v731 = vadd.f32 %v699, 0.0
      %v732 = vadd.f32 %v700, 0.0
      %v733 = vadd.f32 %v701, 0.0
      %v734 = vadd.f32 %v702, 0.0
      %v735 = vadd.f32 %v703, 0.0
      %v736 = vadd.f32 %v704, 0.0
      %v737 = vadd.f32 %v705, 0.0
      %v738 = vadd.f32 %v706, 0.0
      %v739 = vadd.f32 %v707, 0.0
      %v740 = vadd.f32 %v708, 0.0
      %v741 = vadd.f32 %v709, 0.0
      %v742 = vadd.f32 %v710, 0.0
      %v743 = vadd.f32 %v711, 0.0
      %v744 = vadd.f32 %v712, 0.0
      %v745 = vadd.f32 %v713, 0.0
      %v746 = vadd.f32 %v714, 0.0
      %v747 = vadd.f32 %v715, 0.0
      %v748 = vadd.f32 %v716, 0.0
      %v749 = vadd.f32 %v717, 0.0
      %v750 = vadd.f32 %v718, 0.0
      %v751 = vadd.f32 %v719, 0.0
      %v752 = vadd.f32 %v720, 0.0
      %v753 = vadd.f32 %v721, 0.0
      %v754 = vadd.f32 %v722, 0.0
      %v755 = vadd.f32 %v723, 0.0
      %v756 = vadd.f32 %v724, 0.0
      %v757 = vadd.f32 %v725, 0.0
      %v758 = vadd.f32 %v726, 0.0
      %v759 = vadd.f32 %v727, 0.0
      %v760 = vadd.f32 %v728, 0.0
      %v761 = vld [vmem:[#allocation2 + $0x8] sm:$0xff]
      %v762 = vld [vmem:[#allocation2 + $0x10] sm:$0xff]
      %v763 = vld [vmem:[#allocation2 + $0x28] sm:$0xff]
      %v764 = vld [vmem:[#allocation2 + $0x30] sm:$0xff]
      %v765 = vld [vmem:[#allocation2 + $0x48] sm:$0xff]
      %v766 = vld [vmem:[#allocation2 + $0x50] sm:$0xff]
      %v767 = vld [vmem:[#allocation2 + $0x68] sm:$0xff]
      %v768 = vld [vmem:[#allocation2 + $0x70] sm:$0xff]
      %v769 = vld [vmem:[#allocation2 + $0x88] sm:$0xff]
      %v770 = vld [vmem:[#allocation2 + $0x90] sm:$0xff]
      %v771 = vld [vmem:[#allocation2 + $0xa8] sm:$0xff]
      %v772 = vld [vmem:[#allocation2 + $0xb0] sm:$0xff]
      %v773 = vld [vmem:[#allocation2 + $0xc8] sm:$0xff]
      %v774 = vld [vmem:[#allocation2 + $0xd0] sm:$0xff]
      %v775 = vld [vmem:[#allocation2 + $0xe8] sm:$0xff]
      %v776 = vld [vmem:[#allocation2 + $0xf0] sm:$0xff]
      %v777 = vld [vmem:[#allocation2 + $0x108] sm:$0xff]
      %v778 = vld [vmem:[#allocation2 + $0x110] sm:$0xff]
      %v779 = vld [vmem:[#allocation2 + $0x128] sm:$0xff]
      %v780 = vld [vmem:[#allocation2 + $0x130] sm:$0xff]
      %v781 = vld [vmem:[#allocation2 + $0x148] sm:$0xff]
      %v782 = vld [vmem:[#allocation2 + $0x150] sm:$0xff]
      %v783 = vld [vmem:[#allocation2 + $0x168] sm:$0xff]
      %v784 = vld [vmem:[#allocation2 + $0x170] sm:$0xff]
      %v785 = vld [vmem:[#allocation2 + $0x188] sm:$0xff]
      %v786 = vld [vmem:[#allocation2 + $0x190] sm:$0xff]
      %v787 = vld [vmem:[#allocation2 + $0x1a8] sm:$0xff]
      %v788 = vld [vmem:[#allocation2 + $0x1b0] sm:$0xff]
      %v789 = vld [vmem:[#allocation2 + $0x1c8] sm:$0xff]
      %v790 = vld [vmem:[#allocation2 + $0x1d0] sm:$0xff]
      %v791 = vld [vmem:[#allocation2 + $0x1e8] sm:$0xff]
      %v792 = vld [vmem:[#allocation2 + $0x1f0] sm:$0xff]
      %v793 = vlaneseq
      %v794 = vshrl.u32 %v793, 7
      %v795 = vsub.s32 1, %v794
      %v796 = vrot.slane %v659, %v795
      %v797 = vmul.f32 %v761, %v796
      %v798 = vmul.f32 %v762, %v796
      %v799 = vmul.f32 %v763, %v796
      %v800 = vmul.f32 %v764, %v796
      %v801 = vmul.f32 %v765, %v796
      %v802 = vmul.f32 %v766, %v796
      %v803 = vmul.f32 %v767, %v796
      %v804 = vmul.f32 %v768, %v796
      %v805 = vmul.f32 %v769, %v796
      %v806 = vmul.f32 %v770, %v796
      %v807 = vmul.f32 %v771, %v796
      %v808 = vmul.f32 %v772, %v796
      %v809 = vmul.f32 %v773, %v796
      %v810 = vmul.f32 %v774, %v796
      %v811 = vmul.f32 %v775, %v796
      %v812 = vmul.f32 %v776, %v796
      %v813 = vmul.f32 %v777, %v796
      %v814 = vmul.f32 %v778, %v796
      %v815 = vmul.f32 %v779, %v796
      %v816 = vmul.f32 %v780, %v796
      %v817 = vmul.f32 %v781, %v796
      %v818 = vmul.f32 %v782, %v796
      %v819 = vmul.f32 %v783, %v796
      %v820 = vmul.f32 %v784, %v796
      %v821 = vmul.f32 %v785, %v796
      %v822 = vmul.f32 %v786, %v796
      %v823 = vmul.f32 %v787, %v796
      %v824 = vmul.f32 %v788, %v796
      %v825 = vmul.f32 %v789, %v796
      %v826 = vmul.f32 %v790, %v796
      %v827 = vmul.f32 %v791, %v796
      %v828 = vmul.f32 %v792, %v796
      %v829 = vadd.f32 %v729, %v797
      %v830 = vadd.f32 %v730, %v798
      %v831 = vadd.f32 %v731, %v799
      %v832 = vadd.f32 %v732, %v800
      %v833 = vadd.f32 %v733, %v801
      %v834 = vadd.f32 %v734, %v802
      %v835 = vadd.f32 %v735, %v803
      %v836 = vadd.f32 %v736, %v804
      %v837 = vadd.f32 %v737, %v805
      %v838 = vadd.f32 %v738, %v806
      %v839 = vadd.f32 %v739, %v807
      %v840 = vadd.f32 %v740, %v808
      %v841 = vadd.f32 %v741, %v809
      %v842 = vadd.f32 %v742, %v810
      %v843 = vadd.f32 %v743, %v811
      %v844 = vadd.f32 %v744, %v812
      %v845 = vadd.f32 %v745, %v813
      %v846 = vadd.f32 %v746, %v814
      %v847 = vadd.f32 %v747, %v815
      %v848 = vadd.f32 %v748, %v816
      %v849 = vadd.f32 %v749, %v817
      %v850 = vadd.f32 %v750, %v818
      %v851 = vadd.f32 %v751, %v819
      %v852 = vadd.f32 %v752, %v820
      %v853 = vadd.f32 %v753, %v821
      %v854 = vadd.f32 %v754, %v822
      %v855 = vadd.f32 %v755, %v823
      %v856 = vadd.f32 %v756, %v824
      %v857 = vadd.f32 %v757, %v825
      %v858 = vadd.f32 %v758, %v826
      %v859 = vadd.f32 %v759, %v827
      %v860 = vadd.f32 %v760, %v828
      %v861 = vld [vmem:[#allocation2 + $0x9] sm:$0xff]
      %v862 = vld [vmem:[#allocation2 + $0x11] sm:$0xff]
      %v863 = vld [vmem:[#allocation2 + $0x29] sm:$0xff]
      %v864 = vld [vmem:[#allocation2 + $0x31] sm:$0xff]
      %v865 = vld [vmem:[#allocation2 + $0x49] sm:$0xff]
      %v866 = vld [vmem:[#allocation2 + $0x51] sm:$0xff]
      %v867 = vld [vmem:[#allocation2 + $0x69] sm:$0xff]
      %v868 = vld [vmem:[#allocation2 + $0x71] sm:$0xff]
      %v869 = vld [vmem:[#allocation2 + $0x89] sm:$0xff]
      %v870 = vld [vmem:[#allocation2 + $0x91] sm:$0xff]
      %v871 = vld [vmem:[#allocation2 + $0xa9] sm:$0xff]
      %v872 = vld [vmem:[#allocation2 + $0xb1] sm:$0xff]
      %v873 = vld [vmem:[#allocation2 + $0xc9] sm:$0xff]
      %v874 = vld [vmem:[#allocation2 + $0xd1] sm:$0xff]
      %v875 = vld [vmem:[#allocation2 + $0xe9] sm:$0xff]
      %v876 = vld [vmem:[#allocation2 + $0xf1] sm:$0xff]
      %v877 = vld [vmem:[#allocation2 + $0x109] sm:$0xff]
      %v878 = vld [vmem:[#allocation2 + $0x111] sm:$0xff]
      %v879 = vld [vmem:[#allocation2 + $0x129] sm:$0xff]
      %v880 = vld [vmem:[#allocation2 + $0x131] sm:$0xff]
      %v881 = vld [vmem:[#allocation2 + $0x149] sm:$0xff]
      %v882 = vld [vmem:[#allocation2 + $0x151] sm:$0xff]
      %v883 = vld [vmem:[#allocation2 + $0x169] sm:$0xff]
      %v884 = vld [vmem:[#allocation2 + $0x171] sm:$0xff]
      %v885 = vld [vmem:[#allocation2 + $0x189] sm:$0xff]
      %v886 = vld [vmem:[#allocation2 + $0x191] sm:$0xff]
      %v887 = vld [vmem:[#allocation2 + $0x1a9] sm:$0xff]
      %v888 = vld [vmem:[#allocation2 + $0x1b1] sm:$0xff]
      %v889 = vld [vmem:[#allocation2 + $0x1c9] sm:$0xff]
      %v890 = vld [vmem:[#allocation2 + $0x1d1] sm:$0xff]
      %v891 = vld [vmem:[#allocation2 + $0x1e9] sm:$0xff]
      %v892 = vld [vmem:[#allocation2 + $0x1f1] sm:$0xff]
      %v893 = vlaneseq
      %v894 = vshrl.u32 %v893, 7
      %v895 = vsub.s32 2, %v894
      %v896 = vrot.slane %v659, %v895
      %v897 = vmul.f32 %v861, %v896
      %v898 = vmul.f32 %v862, %v896
      %v899 = vmul.f32 %v863, %v896
      %v900 = vmul.f32 %v864, %v896
      %v901 = vmul.f32 %v865, %v896
      %v902 = vmul.f32 %v866, %v896
      %v903 = vmul.f32 %v867, %v896
      %v904 = vmul.f32 %v868, %v896
      %v905 = vmul.f32 %v869, %v896
      %v906 = vmul.f32 %v870, %v896
      %v907 = vmul.f32 %v871, %v896
      %v908 = vmul.f32 %v872, %v896
      %v909 = vmul.f32 %v873, %v896
      %v910 = vmul.f32 %v874, %v896
      %v911 = vmul.f32 %v875, %v896
      %v912 = vmul.f32 %v876, %v896
      %v913 = vmul.f32 %v877, %v896
      %v914 = vmul.f32 %v878, %v896
      %v915 = vmul.f32 %v879, %v896
      %v916 = vmul.f32 %v880, %v896
      %v917 = vmul.f32 %v881, %v896
      %v918 = vmul.f32 %v882, %v896
      %v919 = vmul.f32 %v883, %v896
      %v920 = vmul.f32 %v884, %v896
      %v921 = vmul.f32 %v885, %v896
      %v922 = vmul.f32 %v886, %v896
      %v923 = vmul.f32 %v887, %v896
      %v924 = vmul.f32 %v888, %v896
      %v925 = vmul.f32 %v889, %v896
      %v926 = vmul.f32 %v890, %v896
      %v927 = vmul.f32 %v891, %v896
      %v928 = vmul.f32 %v892, %v896
      %v929 = vadd.f32 %v829, %v897
      %v930 = vadd.f32 %v830, %v898
      %v931 = vadd.f32 %v831, %v899
      %v932 = vadd.f32 %v832, %v900
      %v933 = vadd.f32 %v833, %v901
      %v934 = vadd.f32 %v834, %v902
      %v935 = vadd.f32 %v835, %v903
      %v936 = vadd.f32 %v836, %v904
      %v937 = vadd.f32 %v837, %v905
      %v938 = vadd.f32 %v838, %v906
      %v939 = vadd.f32 %v839, %v907
      %v940 = vadd.f32 %v840, %v908
      %v941 = vadd.f32 %v841, %v909
      %v942 = vadd.f32 %v842, %v910
      %v943 = vadd.f32 %v843, %v911
      %v944 = vadd.f32 %v844, %v912
      %v945 = vadd.f32 %v845, %v913
      %v946 = vadd.f32 %v846, %v914
      %v947 = vadd.f32 %v847, %v915
      %v948 = vadd.f32 %v848, %v916
      %v949 = vadd.f32 %v849, %v917
      %v950 = vadd.f32 %v850, %v918
      %v951 = vadd.f32 %v851, %v919
      %v952 = vadd.f32 %v852, %v920
      %v953 = vadd.f32 %v853, %v921
      %v954 = vadd.f32 %v854, %v922
      %v955 = vadd.f32 %v855, %v923
      %v956 = vadd.f32 %v856, %v924
      %v957 = vadd.f32 %v857, %v925
      %v958 = vadd.f32 %v858, %v926
      %v959 = vadd.f32 %v859, %v927
      %v960 = vadd.f32 %v860, %v928
      %v961 = vld [vmem:[%s235 + $0x7] sm:$0xff]
      %v962 = vld [vmem:[%s235 + $0xf] sm:$0xff]
      %v963 = vld [vmem:[%s235 + $0x27] sm:$0xff]
      %v964 = vld [vmem:[%s235 + $0x2f] sm:$0xff]
      %v965 = vld [vmem:[%s235 + $0x47] sm:$0xff]
      %v966 = vld [vmem:[%s235 + $0x4f] sm:$0xff]
      %v967 = vld [vmem:[%s235 + $0x67] sm:$0xff]
      %v968 = vld [vmem:[%s235 + $0x6f] sm:$0xff]
      %v969 = vld [vmem:[%s235 + $0x87] sm:$0xff]
      %v970 = vld [vmem:[%s235 + $0x8f] sm:$0xff]
      %v971 = vld [vmem:[%s235 + $0xa7] sm:$0xff]
      %v972 = vld [vmem:[%s235 + $0xaf] sm:$0xff]
      %v973 = vld [vmem:[%s235 + $0xc7] sm:$0xff]
      %v974 = vld [vmem:[%s235 + $0xcf] sm:$0xff]
      %v975 = vld [vmem:[%s235 + $0xe7] sm:$0xff]
      %v976 = vld [vmem:[%s235 + $0xef] sm:$0xff]
      %v977 = vld [vmem:[%s235 + $0x107] sm:$0xff]
      %v978 = vld [vmem:[%s235 + $0x10f] sm:$0xff]
      %v979 = vld [vmem:[%s235 + $0x127] sm:$0xff]
      %v980 = vld [vmem:[%s235 + $0x12f] sm:$0xff]
      %v981 = vld [vmem:[%s235 + $0x147] sm:$0xff]
      %v982 = vld [vmem:[%s235 + $0x14f] sm:$0xff]
      %v983 = vld [vmem:[%s235 + $0x167] sm:$0xff]
      %v984 = vld [vmem:[%s235 + $0x16f] sm:$0xff]
      %v985 = vld [vmem:[%s235 + $0x187] sm:$0xff]
      %v986 = vld [vmem:[%s235 + $0x18f] sm:$0xff]
      %v987 = vld [vmem:[%s235 + $0x1a7] sm:$0xff]
      %v988 = vld [vmem:[%s235 + $0x1af] sm:$0xff]
      %v989 = vld [vmem:[%s235 + $0x1c7] sm:$0xff]
      %v990 = vld [vmem:[%s235 + $0x1cf] sm:$0xff]
      %v991 = vld [vmem:[%s235 + $0x1e7] sm:$0xff]
      %v992 = vld [vmem:[%s235 + $0x1ef] sm:$0xff]
      %v993 = vlaneseq
      %v994 = vshrl.u32 %v993, 7
      %v995 = vsub.s32 3, %v994
      %v996 = vrot.slane %v659, %v995
      %v997 = vmul.f32 %v961, %v996
      %v998 = vmul.f32 %v962, %v996
      %v999 = vmul.f32 %v963, %v996
      %v1000 = vmul.f32 %v964, %v996
      %v1001 = vmul.f32 %v965, %v996
      %v1002 = vmul.f32 %v966, %v996
      %v1003 = vmul.f32 %v967, %v996
      %v1004 = vmul.f32 %v968, %v996
      %v1005 = vmul.f32 %v969, %v996
      %v1006 = vmul.f32 %v970, %v996
      %v1007 = vmul.f32 %v971, %v996
      %v1008 = vmul.f32 %v972, %v996
      %v1009 = vmul.f32 %v973, %v996
      %v1010 = vmul.f32 %v974, %v996
      %v1011 = vmul.f32 %v975, %v996
      %v1012 = vmul.f32 %v976, %v996
      %v1013 = vmul.f32 %v977, %v996
      %v1014 = vmul.f32 %v978, %v996
      %v1015 = vmul.f32 %v979, %v996
      %v1016 = vmul.f32 %v980, %v996
      %v1017 = vmul.f32 %v981, %v996
      %v1018 = vmul.f32 %v982, %v996
      %v1019 = vmul.f32 %v983, %v996
      %v1020 = vmul.f32 %v984, %v996
      %v1021 = vmul.f32 %v985, %v996
      %v1022 = vmul.f32 %v986, %v996
      %v1023 = vmul.f32 %v987, %v996
      %v1024 = vmul.f32 %v988, %v996
      %v1025 = vmul.f32 %v989, %v996
      %v1026 = vmul.f32 %v990, %v996
      %v1027 = vmul.f32 %v991, %v996
      %v1028 = vmul.f32 %v992, %v996
      %v1029 = vadd.f32 %v929, %v997
      %v1030 = vadd.f32 %v930, %v998
      %v1031 = vadd.f32 %v931, %v999
      %v1032 = vadd.f32 %v932, %v1000
      %v1033 = vadd.f32 %v933, %v1001
      %v1034 = vadd.f32 %v934, %v1002
      %v1035 = vadd.f32 %v935, %v1003
      %v1036 = vadd.f32 %v936, %v1004
      %v1037 = vadd.f32 %v937, %v1005
      %v1038 = vadd.f32 %v938, %v1006
      %v1039 = vadd.f32 %v939, %v1007
      %v1040 = vadd.f32 %v940, %v1008
      %v1041 = vadd.f32 %v941, %v1009
      %v1042 = vadd.f32 %v942, %v1010
      %v1043 = vadd.f32 %v943, %v1011
      %v1044 = vadd.f32 %v944, %v1012
      %v1045 = vadd.f32 %v945, %v1013
      %v1046 = vadd.f32 %v946, %v1014
      %v1047 = vadd.f32 %v947, %v1015
      %v1048 = vadd.f32 %v948, %v1016
      %v1049 = vadd.f32 %v949, %v1017
      %v1050 = vadd.f32 %v950, %v1018
      %v1051 = vadd.f32 %v951, %v1019
      %v1052 = vadd.f32 %v952, %v1020
      %v1053 = vadd.f32 %v953, %v1021
      %v1054 = vadd.f32 %v954, %v1022
      %v1055 = vadd.f32 %v955, %v1023
      %v1056 = vadd.f32 %v956, %v1024
      %v1057 = vadd.f32 %v957, %v1025
      %v1058 = vadd.f32 %v958, %v1026
      %v1059 = vadd.f32 %v959, %v1027
      %v1060 = vadd.f32 %v960, %v1028
      %v1061 = vld [vmem:[%s235 + $0x8] sm:$0xff]
      %v1062 = vld [vmem:[%s235 + $0x10] sm:$0xff]
      %v1063 = vld [vmem:[%s235 + $0x28] sm:$0xff]
      %v1064 = vld [vmem:[%s235 + $0x30] sm:$0xff]
      %v1065 = vld [vmem:[%s235 + $0x48] sm:$0xff]
      %v1066 = vld [vmem:[%s235 + $0x50] sm:$0xff]
      %v1067 = vld [vmem:[%s235 + $0x68] sm:$0xff]
      %v1068 = vld [vmem:[%s235 + $0x70] sm:$0xff]
      %v1069 = vld [vmem:[%s235 + $0x88] sm:$0xff]
      %v1070 = vld [vmem:[%s235 + $0x90] sm:$0xff]
      %v1071 = vld [vmem:[%s235 + $0xa8] sm:$0xff]
      %v1072 = vld [vmem:[%s235 + $0xb0] sm:$0xff]
      %v1073 = vld [vmem:[%s235 + $0xc8] sm:$0xff]
      %v1074 = vld [vmem:[%s235 + $0xd0] sm:$0xff]
      %v1075 = vld [vmem:[%s235 + $0xe8] sm:$0xff]
      %v1076 = vld [vmem:[%s235 + $0xf0] sm:$0xff]
      %v1077 = vld [vmem:[%s235 + $0x108] sm:$0xff]
      %v1078 = vld [vmem:[%s235 + $0x110] sm:$0xff]
      %v1079 = vld [vmem:[%s235 + $0x128] sm:$0xff]
      %v1080 = vld [vmem:[%s235 + $0x130] sm:$0xff]
      %v1081 = vld [vmem:[%s235 + $0x148] sm:$0xff]
      %v1082 = vld [vmem:[%s235 + $0x150] sm:$0xff]
      %v1083 = vld [vmem:[%s235 + $0x168] sm:$0xff]
      %v1084 = vld [vmem:[%s235 + $0x170] sm:$0xff]
      %v1085 = vld [vmem:[%s235 + $0x188] sm:$0xff]
      %v1086 = vld [vmem:[%s235 + $0x190] sm:$0xff]
      %v1087 = vld [vmem:[%s235 + $0x1a8] sm:$0xff]
      %v1088 = vld [vmem:[%s235 + $0x1b0] sm:$0xff]
      %v1089 = vld [vmem:[%s235 + $0x1c8] sm:$0xff]
      %v1090 = vld [vmem:[%s235 + $0x1d0] sm:$0xff]
      %v1091 = vld [vmem:[%s235 + $0x1e8] sm:$0xff]
      %v1092 = vld [vmem:[%s235 + $0x1f0] sm:$0xff]
      %v1093 = vlaneseq
      %v1094 = vshrl.u32 %v1093, 7
      %v1095 = vsub.s32 4, %v1094
      %v1096 = vrot.slane %v659, %v1095
      %v1097 = vmul.f32 %v1061, %v1096
      %v1098 = vmul.f32 %v1062, %v1096
      %v1099 = vmul.f32 %v1063, %v1096
      %v1100 = vmul.f32 %v1064, %v1096
      %v1101 = vmul.f32 %v1065, %v1096
      %v1102 = vmul.f32 %v1066, %v1096
      %v1103 = vmul.f32 %v1067, %v1096
      %v1104 = vmul.f32 %v1068, %v1096
      %v1105 = vmul.f32 %v1069, %v1096
      %v1106 = vmul.f32 %v1070, %v1096
      %v1107 = vmul.f32 %v1071, %v1096
      %v1108 = vmul.f32 %v1072, %v1096
      %v1109 = vmul.f32 %v1073, %v1096
      %v1110 = vmul.f32 %v1074, %v1096
      %v1111 = vmul.f32 %v1075, %v1096
      %v1112 = vmul.f32 %v1076, %v1096
      %v1113 = vmul.f32 %v1077, %v1096
      %v1114 = vmul.f32 %v1078, %v1096
      %v1115 = vmul.f32 %v1079, %v1096
      %v1116 = vmul.f32 %v1080, %v1096
      %v1117 = vmul.f32 %v1081, %v1096
      %v1118 = vmul.f32 %v1082, %v1096
      %v1119 = vmul.f32 %v1083, %v1096
      %v1120 = vmul.f32 %v1084, %v1096
      %v1121 = vmul.f32 %v1085, %v1096
      %v1122 = vmul.f32 %v1086, %v1096
      %v1123 = vmul.f32 %v1087, %v1096
      %v1124 = vmul.f32 %v1088, %v1096
      %v1125 = vmul.f32 %v1089, %v1096
      %v1126 = vmul.f32 %v1090, %v1096
      %v1127 = vmul.f32 %v1091, %v1096
      %v1128 = vmul.f32 %v1092, %v1096
      %v1129 = vadd.f32 %v1029, %v1097
      %v1130 = vadd.f32 %v1030, %v1098
      %v1131 = vadd.f32 %v1031, %v1099
      %v1132 = vadd.f32 %v1032, %v1100
      %v1133 = vadd.f32 %v1033, %v1101
      %v1134 = vadd.f32 %v1034, %v1102
      %v1135 = vadd.f32 %v1035, %v1103
      %v1136 = vadd.f32 %v1036, %v1104
      %v1137 = vadd.f32 %v1037, %v1105
      %v1138 = vadd.f32 %v1038, %v1106
      %v1139 = vadd.f32 %v1039, %v1107
      %v1140 = vadd.f32 %v1040, %v1108
      %v1141 = vadd.f32 %v1041, %v1109
      %v1142 = vadd.f32 %v1042, %v1110
      %v1143 = vadd.f32 %v1043, %v1111
      %v1144 = vadd.f32 %v1044, %v1112
      %v1145 = vadd.f32 %v1045, %v1113
      %v1146 = vadd.f32 %v1046, %v1114
      %v1147 = vadd.f32 %v1047, %v1115
      %v1148 = vadd.f32 %v1048, %v1116
      %v1149 = vadd.f32 %v1049, %v1117
      %v1150 = vadd.f32 %v1050, %v1118
      %v1151 = vadd.f32 %v1051, %v1119
      %v1152 = vadd.f32 %v1052, %v1120
      %v1153 = vadd.f32 %v1053, %v1121
      %v1154 = vadd.f32 %v1054, %v1122
      %v1155 = vadd.f32 %v1055, %v1123
      %v1156 = vadd.f32 %v1056, %v1124
      %v1157 = vadd.f32 %v1057, %v1125
      %v1158 = vadd.f32 %v1058, %v1126
      %v1159 = vadd.f32 %v1059, %v1127
      %v1160 = vadd.f32 %v1060, %v1128
      %v1161 = vld [vmem:[%s235 + $0x9] sm:$0xff]
      %v1162 = vld [vmem:[%s235 + $0x11] sm:$0xff]
      %v1163 = vld [vmem:[%s235 + $0x29] sm:$0xff]
      %v1164 = vld [vmem:[%s235 + $0x31] sm:$0xff]
      %v1165 = vld [vmem:[%s235 + $0x49] sm:$0xff]
      %v1166 = vld [vmem:[%s235 + $0x51] sm:$0xff]
      %v1167 = vld [vmem:[%s235 + $0x69] sm:$0xff]
      %v1168 = vld [vmem:[%s235 + $0x71] sm:$0xff]
      %v1169 = vld [vmem:[%s235 + $0x89] sm:$0xff]
      %v1170 = vld [vmem:[%s235 + $0x91] sm:$0xff]
      %v1171 = vld [vmem:[%s235 + $0xa9] sm:$0xff]
      %v1172 = vld [vmem:[%s235 + $0xb1] sm:$0xff]
      %v1173 = vld [vmem:[%s235 + $0xc9] sm:$0xff]
      %v1174 = vld [vmem:[%s235 + $0xd1] sm:$0xff]
      %v1175 = vld [vmem:[%s235 + $0xe9] sm:$0xff]
      %v1176 = vld [vmem:[%s235 + $0xf1] sm:$0xff]
      %v1177 = vld [vmem:[%s235 + $0x109] sm:$0xff]
      %v1178 = vld [vmem:[%s235 + $0x111] sm:$0xff]
      %v1179 = vld [vmem:[%s235 + $0x129] sm:$0xff]
      %v1180 = vld [vmem:[%s235 + $0x131] sm:$0xff]
      %v1181 = vld [vmem:[%s235 + $0x149] sm:$0xff]
      %v1182 = vld [vmem:[%s235 + $0x151] sm:$0xff]
      %v1183 = vld [vmem:[%s235 + $0x169] sm:$0xff]
      %v1184 = vld [vmem:[%s235 + $0x171] sm:$0xff]
      %v1185 = vld [vmem:[%s235 + $0x189] sm:$0xff]
      %v1186 = vld [vmem:[%s235 + $0x191] sm:$0xff]
      %v1187 = vld [vmem:[%s235 + $0x1a9] sm:$0xff]
      %v1188 = vld [vmem:[%s235 + $0x1b1] sm:$0xff]
      %v1189 = vld [vmem:[%s235 + $0x1c9] sm:$0xff]
      %v1190 = vld [vmem:[%s235 + $0x1d1] sm:$0xff]
      %v1191 = vld [vmem:[%s235 + $0x1e9] sm:$0xff]
      %v1192 = vld [vmem:[%s235 + $0x1f1] sm:$0xff]
      %v1193 = vlaneseq
      %v1194 = vshrl.u32 %v1193, 7
      %v1195 = vsub.s32 5, %v1194
      %v1196 = vrot.slane %v659, %v1195
      %v1197 = vmul.f32 %v1161, %v1196
      %v1198 = vmul.f32 %v1162, %v1196
      %v1199 = vmul.f32 %v1163, %v1196
      %v1200 = vmul.f32 %v1164, %v1196
      %v1201 = vmul.f32 %v1165, %v1196
      %v1202 = vmul.f32 %v1166, %v1196
      %v1203 = vmul.f32 %v1167, %v1196
      %v1204 = vmul.f32 %v1168, %v1196
      %v1205 = vmul.f32 %v1169, %v1196
      %v1206 = vmul.f32 %v1170, %v1196
      %v1207 = vmul.f32 %v1171, %v1196
      %v1208 = vmul.f32 %v1172, %v1196
      %v1209 = vmul.f32 %v1173, %v1196
      %v1210 = vmul.f32 %v1174, %v1196
      %v1211 = vmul.f32 %v1175, %v1196
      %v1212 = vmul.f32 %v1176, %v1196
      %v1213 = vmul.f32 %v1177, %v1196
      %v1214 = vmul.f32 %v1178, %v1196
      %v1215 = vmul.f32 %v1179, %v1196
      %v1216 = vmul.f32 %v1180, %v1196
      %v1217 = vmul.f32 %v1181, %v1196
      %v1218 = vmul.f32 %v1182, %v1196
      %v1219 = vmul.f32 %v1183, %v1196
      %v1220 = vmul.f32 %v1184, %v1196
      %v1221 = vmul.f32 %v1185, %v1196
      %v1222 = vmul.f32 %v1186, %v1196
      %v1223 = vmul.f32 %v1187, %v1196
      %v1224 = vmul.f32 %v1188, %v1196
      %v1225 = vmul.f32 %v1189, %v1196
      %v1226 = vmul.f32 %v1190, %v1196
      %v1227 = vmul.f32 %v1191, %v1196
      %v1228 = vmul.f32 %v1192, %v1196
      %v1229 = vadd.f32 %v1129, %v1197
      %v1230 = vadd.f32 %v1130, %v1198
      %v1231 = vadd.f32 %v1131, %v1199
      %v1232 = vadd.f32 %v1132, %v1200
      %v1233 = vadd.f32 %v1133, %v1201
      %v1234 = vadd.f32 %v1134, %v1202
      %v1235 = vadd.f32 %v1135, %v1203
      %v1236 = vadd.f32 %v1136, %v1204
      %v1237 = vadd.f32 %v1137, %v1205
      %v1238 = vadd.f32 %v1138, %v1206
      %v1239 = vadd.f32 %v1139, %v1207
      %v1240 = vadd.f32 %v1140, %v1208
      %v1241 = vadd.f32 %v1141, %v1209
      %v1242 = vadd.f32 %v1142, %v1210
      %v1243 = vadd.f32 %v1143, %v1211
      %v1244 = vadd.f32 %v1144, %v1212
      %v1245 = vadd.f32 %v1145, %v1213
      %v1246 = vadd.f32 %v1146, %v1214
      %v1247 = vadd.f32 %v1147, %v1215
      %v1248 = vadd.f32 %v1148, %v1216
      %v1249 = vadd.f32 %v1149, %v1217
      %v1250 = vadd.f32 %v1150, %v1218
      %v1251 = vadd.f32 %v1151, %v1219
      %v1252 = vadd.f32 %v1152, %v1220
      %v1253 = vadd.f32 %v1153, %v1221
      %v1254 = vadd.f32 %v1154, %v1222
      %v1255 = vadd.f32 %v1155, %v1223
      %v1256 = vadd.f32 %v1156, %v1224
      %v1257 = vadd.f32 %v1157, %v1225
      %v1258 = vadd.f32 %v1158, %v1226
      %v1259 = vadd.f32 %v1159, %v1227
      %v1260 = vadd.f32 %v1160, %v1228
      %s1261 = scalar_lea.vmem [#allocation2], 64
      %v1262 = vld [vmem:[%s1261 + $0x7] sm:$0xff]
      %v1263 = vld [vmem:[%s1261 + $0xf] sm:$0xff]
      %v1264 = vld [vmem:[%s1261 + $0x27] sm:$0xff]
      %v1265 = vld [vmem:[%s1261 + $0x2f] sm:$0xff]
      %v1266 = vld [vmem:[%s1261 + $0x47] sm:$0xff]
      %v1267 = vld [vmem:[%s1261 + $0x4f] sm:$0xff]
      %v1268 = vld [vmem:[%s1261 + $0x67] sm:$0xff]
      %v1269 = vld [vmem:[%s1261 + $0x6f] sm:$0xff]
      %v1270 = vld [vmem:[%s1261 + $0x87] sm:$0xff]
      %v1271 = vld [vmem:[%s1261 + $0x8f] sm:$0xff]
      %v1272 = vld [vmem:[%s1261 + $0xa7] sm:$0xff]
      %v1273 = vld [vmem:[%s1261 + $0xaf] sm:$0xff]
      %v1274 = vld [vmem:[%s1261 + $0xc7] sm:$0xff]
      %v1275 = vld [vmem:[%s1261 + $0xcf] sm:$0xff]
      %v1276 = vld [vmem:[%s1261 + $0xe7] sm:$0xff]
      %v1277 = vld [vmem:[%s1261 + $0xef] sm:$0xff]
      %v1278 = vld [vmem:[%s1261 + $0x107] sm:$0xff]
      %v1279 = vld [vmem:[%s1261 + $0x10f] sm:$0xff]
      %v1280 = vld [vmem:[%s1261 + $0x127] sm:$0xff]
      %v1281 = vld [vmem:[%s1261 + $0x12f] sm:$0xff]
      %v1282 = vld [vmem:[%s1261 + $0x147] sm:$0xff]
      %v1283 = vld [vmem:[%s1261 + $0x14f] sm:$0xff]
      %v1284 = vld [vmem:[%s1261 + $0x167] sm:$0xff]
      %v1285 = vld [vmem:[%s1261 + $0x16f] sm:$0xff]
      %v1286 = vld [vmem:[%s1261 + $0x187] sm:$0xff]
      %v1287 = vld [vmem:[%s1261 + $0x18f] sm:$0xff]
      %v1288 = vld [vmem:[%s1261 + $0x1a7] sm:$0xff]
      %v1289 = vld [vmem:[%s1261 + $0x1af] sm:$0xff]
      %v1290 = vld [vmem:[%s1261 + $0x1c7] sm:$0xff]
      %v1291 = vld [vmem:[%s1261 + $0x1cf] sm:$0xff]
      %v1292 = vld [vmem:[%s1261 + $0x1e7] sm:$0xff]
      %v1293 = vld [vmem:[%s1261 + $0x1ef] sm:$0xff]
      %v1294 = vlaneseq
      %v1295 = vshrl.u32 %v1294, 7
      %v1296 = vsub.s32 6, %v1295
      %v1297 = vrot.slane %v659, %v1296
      %v1298 = vmul.f32 %v1262, %v1297
      %v1299 = vmul.f32 %v1263, %v1297
      %v1300 = vmul.f32 %v1264, %v1297
      %v1301 = vmul.f32 %v1265, %v1297
      %v1302 = vmul.f32 %v1266, %v1297
      %v1303 = vmul.f32 %v1267, %v1297
      %v1304 = vmul.f32 %v1268, %v1297
      %v1305 = vmul.f32 %v1269, %v1297
      %v1306 = vmul.f32 %v1270, %v1297
      %v1307 = vmul.f32 %v1271, %v1297
      %v1308 = vmul.f32 %v1272, %v1297
      %v1309 = vmul.f32 %v1273, %v1297
      %v1310 = vmul.f32 %v1274, %v1297
      %v1311 = vmul.f32 %v1275, %v1297
      %v1312 = vmul.f32 %v1276, %v1297
      %v1313 = vmul.f32 %v1277, %v1297
      %v1314 = vmul.f32 %v1278, %v1297
      %v1315 = vmul.f32 %v1279, %v1297
      %v1316 = vmul.f32 %v1280, %v1297
      %v1317 = vmul.f32 %v1281, %v1297
      %v1318 = vmul.f32 %v1282, %v1297
      %v1319 = vmul.f32 %v1283, %v1297
      %v1320 = vmul.f32 %v1284, %v1297
      %v1321 = vmul.f32 %v1285, %v1297
      %v1322 = vmul.f32 %v1286, %v1297
      %v1323 = vmul.f32 %v1287, %v1297
      %v1324 = vmul.f32 %v1288, %v1297
      %v1325 = vmul.f32 %v1289, %v1297
      %v1326 = vmul.f32 %v1290, %v1297
      %v1327 = vmul.f32 %v1291, %v1297
      %v1328 = vmul.f32 %v1292, %v1297
      %v1329 = vmul.f32 %v1293, %v1297
      %v1330 = vadd.f32 %v1229, %v1298
      %v1331 = vadd.f32 %v1230, %v1299
      %v1332 = vadd.f32 %v1231, %v1300
      %v1333 = vadd.f32 %v1232, %v1301
      %v1334 = vadd.f32 %v1233, %v1302
      %v1335 = vadd.f32 %v1234, %v1303
      %v1336 = vadd.f32 %v1235, %v1304
      %v1337 = vadd.f32 %v1236, %v1305
      %v1338 = vadd.f32 %v1237, %v1306
      %v1339 = vadd.f32 %v1238, %v1307
      %v1340 = vadd.f32 %v1239, %v1308
      %v1341 = vadd.f32 %v1240, %v1309
      %v1342 = vadd.f32 %v1241, %v1310
      %v1343 = vadd.f32 %v1242, %v1311
      %v1344 = vadd.f32 %v1243, %v1312
      %v1345 = vadd.f32 %v1244, %v1313
      %v1346 = vadd.f32 %v1245, %v1314
      %v1347 = vadd.f32 %v1246, %v1315
      %v1348 = vadd.f32 %v1247, %v1316
      %v1349 = vadd.f32 %v1248, %v1317
      %v1350 = vadd.f32 %v1249, %v1318
      %v1351 = vadd.f32 %v1250, %v1319
      %v1352 = vadd.f32 %v1251, %v1320
      %v1353 = vadd.f32 %v1252, %v1321
      %v1354 = vadd.f32 %v1253, %v1322
      %v1355 = vadd.f32 %v1254, %v1323
      %v1356 = vadd.f32 %v1255, %v1324
      %v1357 = vadd.f32 %v1256, %v1325
      %v1358 = vadd.f32 %v1257, %v1326
      %v1359 = vadd.f32 %v1258, %v1327
      %v1360 = vadd.f32 %v1259, %v1328
      %v1361 = vadd.f32 %v1260, %v1329
      %v1362 = vld [vmem:[%s1261 + $0x8] sm:$0xff]
      %v1363 = vld [vmem:[%s1261 + $0x10] sm:$0xff]
      %v1364 = vld [vmem:[%s1261 + $0x28] sm:$0xff]
      %v1365 = vld [vmem:[%s1261 + $0x30] sm:$0xff]
      %v1366 = vld [vmem:[%s1261 + $0x48] sm:$0xff]
      %v1367 = vld [vmem:[%s1261 + $0x50] sm:$0xff]
      %v1368 = vld [vmem:[%s1261 + $0x68] sm:$0xff]
      %v1369 = vld [vmem:[%s1261 + $0x70] sm:$0xff]
      %v1370 = vld [vmem:[%s1261 + $0x88] sm:$0xff]
      %v1371 = vld [vmem:[%s1261 + $0x90] sm:$0xff]
      %v1372 = vld [vmem:[%s1261 + $0xa8] sm:$0xff]
      %v1373 = vld [vmem:[%s1261 + $0xb0] sm:$0xff]
      %v1374 = vld [vmem:[%s1261 + $0xc8] sm:$0xff]
      %v1375 = vld [vmem:[%s1261 + $0xd0] sm:$0xff]
      %v1376 = vld [vmem:[%s1261 + $0xe8] sm:$0xff]
      %v1377 = vld [vmem:[%s1261 + $0xf0] sm:$0xff]
      %v1378 = vld [vmem:[%s1261 + $0x108] sm:$0xff]
      %v1379 = vld [vmem:[%s1261 + $0x110] sm:$0xff]
      %v1380 = vld [vmem:[%s1261 + $0x128] sm:$0xff]
      %v1381 = vld [vmem:[%s1261 + $0x130] sm:$0xff]
      %v1382 = vld [vmem:[%s1261 + $0x148] sm:$0xff]
      %v1383 = vld [vmem:[%s1261 + $0x150] sm:$0xff]
      %v1384 = vld [vmem:[%s1261 + $0x168] sm:$0xff]
      %v1385 = vld [vmem:[%s1261 + $0x170] sm:$0xff]
      %v1386 = vld [vmem:[%s1261 + $0x188] sm:$0xff]
      %v1387 = vld [vmem:[%s1261 + $0x190] sm:$0xff]
      %v1388 = vld [vmem:[%s1261 + $0x1a8] sm:$0xff]
      %v1389 = vld [vmem:[%s1261 + $0x1b0] sm:$0xff]
      %v1390 = vld [vmem:[%s1261 + $0x1c8] sm:$0xff]
      %v1391 = vld [vmem:[%s1261 + $0x1d0] sm:$0xff]
      %v1392 = vld [vmem:[%s1261 + $0x1e8] sm:$0xff]
      %v1393 = vld [vmem:[%s1261 + $0x1f0] sm:$0xff]
      %v1394 = vlaneseq
      %v1395 = vshrl.u32 %v1394, 7
      %v1396 = vsub.s32 7, %v1395
      %v1397 = vrot.slane %v659, %v1396
      %v1398 = vmul.f32 %v1362, %v1397
      %v1399 = vmul.f32 %v1363, %v1397
      %v1400 = vmul.f32 %v1364, %v1397
      %v1401 = vmul.f32 %v1365, %v1397
      %v1402 = vmul.f32 %v1366, %v1397
      %v1403 = vmul.f32 %v1367, %v1397
      %v1404 = vmul.f32 %v1368, %v1397
      %v1405 = vmul.f32 %v1369, %v1397
      %v1406 = vmul.f32 %v1370, %v1397
      %v1407 = vmul.f32 %v1371, %v1397
      %v1408 = vmul.f32 %v1372, %v1397
      %v1409 = vmul.f32 %v1373, %v1397
      %v1410 = vmul.f32 %v1374, %v1397
      %v1411 = vmul.f32 %v1375, %v1397
      %v1412 = vmul.f32 %v1376, %v1397
      %v1413 = vmul.f32 %v1377, %v1397
      %v1414 = vmul.f32 %v1378, %v1397
      %v1415 = vmul.f32 %v1379, %v1397
      %v1416 = vmul.f32 %v1380, %v1397
      %v1417 = vmul.f32 %v1381, %v1397
      %v1418 = vmul.f32 %v1382, %v1397
      %v1419 = vmul.f32 %v1383, %v1397
      %v1420 = vmul.f32 %v1384, %v1397
      %v1421 = vmul.f32 %v1385, %v1397
      %v1422 = vmul.f32 %v1386, %v1397
      %v1423 = vmul.f32 %v1387, %v1397
      %v1424 = vmul.f32 %v1388, %v1397
      %v1425 = vmul.f32 %v1389, %v1397
      %v1426 = vmul.f32 %v1390, %v1397
      %v1427 = vmul.f32 %v1391, %v1397
      %v1428 = vmul.f32 %v1392, %v1397
      %v1429 = vmul.f32 %v1393, %v1397
      %v1430 = vadd.f32 %v1330, %v1398
      %v1431 = vadd.f32 %v1331, %v1399
      %v1432 = vadd.f32 %v1332, %v1400
      %v1433 = vadd.f32 %v1333, %v1401
      %v1434 = vadd.f32 %v1334, %v1402
      %v1435 = vadd.f32 %v1335, %v1403
      %v1436 = vadd.f32 %v1336, %v1404
      %v1437 = vadd.f32 %v1337, %v1405
      %v1438 = vadd.f32 %v1338, %v1406
      %v1439 = vadd.f32 %v1339, %v1407
      %v1440 = vadd.f32 %v1340, %v1408
      %v1441 = vadd.f32 %v1341, %v1409
      %v1442 = vadd.f32 %v1342, %v1410
      %v1443 = vadd.f32 %v1343, %v1411
      %v1444 = vadd.f32 %v1344, %v1412
      %v1445 = vadd.f32 %v1345, %v1413
      %v1446 = vadd.f32 %v1346, %v1414
      %v1447 = vadd.f32 %v1347, %v1415
      %v1448 = vadd.f32 %v1348, %v1416
      %v1449 = vadd.f32 %v1349, %v1417
      %v1450 = vadd.f32 %v1350, %v1418
      %v1451 = vadd.f32 %v1351, %v1419
      %v1452 = vadd.f32 %v1352, %v1420
      %v1453 = vadd.f32 %v1353, %v1421
      %v1454 = vadd.f32 %v1354, %v1422
      %v1455 = vadd.f32 %v1355, %v1423
      %v1456 = vadd.f32 %v1356, %v1424
      %v1457 = vadd.f32 %v1357, %v1425
      %v1458 = vadd.f32 %v1358, %v1426
      %v1459 = vadd.f32 %v1359, %v1427
      %v1460 = vadd.f32 %v1360, %v1428
      %v1461 = vadd.f32 %v1361, %v1429
      %v1462 = vld [vmem:[%s1261 + $0x9] sm:$0xff]
      %v1463 = vld [vmem:[%s1261 + $0x11] sm:$0xff]
      %v1464 = vld [vmem:[%s1261 + $0x29] sm:$0xff]
      %v1465 = vld [vmem:[%s1261 + $0x31] sm:$0xff]
      %v1466 = vld [vmem:[%s1261 + $0x49] sm:$0xff]
      %v1467 = vld [vmem:[%s1261 + $0x51] sm:$0xff]
      %v1468 = vld [vmem:[%s1261 + $0x69] sm:$0xff]
      %v1469 = vld [vmem:[%s1261 + $0x71] sm:$0xff]
      %v1470 = vld [vmem:[%s1261 + $0x89] sm:$0xff]
      %v1471 = vld [vmem:[%s1261 + $0x91] sm:$0xff]
      %v1472 = vld [vmem:[%s1261 + $0xa9] sm:$0xff]
      %v1473 = vld [vmem:[%s1261 + $0xb1] sm:$0xff]
      %v1474 = vld [vmem:[%s1261 + $0xc9] sm:$0xff]
      %v1475 = vld [vmem:[%s1261 + $0xd1] sm:$0xff]
      %v1476 = vld [vmem:[%s1261 + $0xe9] sm:$0xff]
      %v1477 = vld [vmem:[%s1261 + $0xf1] sm:$0xff]
      %v1478 = vld [vmem:[%s1261 + $0x109] sm:$0xff]
      %v1479 = vld [vmem:[%s1261 + $0x111] sm:$0xff]
      %v1480 = vld [vmem:[%s1261 + $0x129] sm:$0xff]
      %v1481 = vld [vmem:[%s1261 + $0x131] sm:$0xff]
      %v1482 = vld [vmem:[%s1261 + $0x149] sm:$0xff]
      %v1483 = vld [vmem:[%s1261 + $0x151] sm:$0xff]
      %v1484 = vld [vmem:[%s1261 + $0x169] sm:$0xff]
      %v1485 = vld [vmem:[%s1261 + $0x171] sm:$0xff]
      %v1486 = vld [vmem:[%s1261 + $0x189] sm:$0xff]
      %v1487 = vld [vmem:[%s1261 + $0x191] sm:$0xff]
      %v1488 = vld [vmem:[%s1261 + $0x1a9] sm:$0xff]
      %v1489 = vld [vmem:[%s1261 + $0x1b1] sm:$0xff]
      %v1490 = vld [vmem:[%s1261 + $0x1c9] sm:$0xff]
      %v1491 = vld [vmem:[%s1261 + $0x1d1] sm:$0xff]
      %v1492 = vld [vmem:[%s1261 + $0x1e9] sm:$0xff]
      %v1493 = vld [vmem:[%s1261 + $0x1f1] sm:$0xff]
      %v1494 = vlaneseq
      %v1495 = vshrl.u32 %v1494, 7
      %v1496 = vsub.s32 0, %v1495
      %v1497 = vrot.slane %v660, %v1496
      %v1498 = vmul.f32 %v1462, %v1497
      %v1499 = vmul.f32 %v1463, %v1497
      %v1500 = vmul.f32 %v1464, %v1497
      %v1501 = vmul.f32 %v1465, %v1497
      %v1502 = vmul.f32 %v1466, %v1497
      %v1503 = vmul.f32 %v1467, %v1497
      %v1504 = vmul.f32 %v1468, %v1497
      %v1505 = vmul.f32 %v1469, %v1497
      %v1506 = vmul.f32 %v1470, %v1497
      %v1507 = vmul.f32 %v1471, %v1497
      %v1508 = vmul.f32 %v1472, %v1497
      %v1509 = vmul.f32 %v1473, %v1497
      %v1510 = vmul.f32 %v1474, %v1497
      %v1511 = vmul.f32 %v1475, %v1497
      %v1512 = vmul.f32 %v1476, %v1497
      %v1513 = vmul.f32 %v1477, %v1497
      %v1514 = vmul.f32 %v1478, %v1497
      %v1515 = vmul.f32 %v1479, %v1497
      %v1516 = vmul.f32 %v1480, %v1497
      %v1517 = vmul.f32 %v1481, %v1497
      %v1518 = vmul.f32 %v1482, %v1497
      %v1519 = vmul.f32 %v1483, %v1497
      %v1520 = vmul.f32 %v1484, %v1497
      %v1521 = vmul.f32 %v1485, %v1497
      %v1522 = vmul.f32 %v1486, %v1497
      %v1523 = vmul.f32 %v1487, %v1497
      %v1524 = vmul.f32 %v1488, %v1497
      %v1525 = vmul.f32 %v1489, %v1497
      %v1526 = vmul.f32 %v1490, %v1497
      %v1527 = vmul.f32 %v1491, %v1497
      %v1528 = vmul.f32 %v1492, %v1497
      %v1529 = vmul.f32 %v1493, %v1497
      %v1530 = vadd.f32 %v1430, %v1498
      %v1531 = vadd.f32 %v1431, %v1499
      %v1532 = vadd.f32 %v1432, %v1500
      %v1533 = vadd.f32 %v1433, %v1501
      %v1534 = vadd.f32 %v1434, %v1502
      %v1535 = vadd.f32 %v1435, %v1503
      %v1536 = vadd.f32 %v1436, %v1504
      %v1537 = vadd.f32 %v1437, %v1505
      %v1538 = vadd.f32 %v1438, %v1506
      %v1539 = vadd.f32 %v1439, %v1507
      %v1540 = vadd.f32 %v1440, %v1508
      %v1541 = vadd.f32 %v1441, %v1509
      %v1542 = vadd.f32 %v1442, %v1510
      %v1543 = vadd.f32 %v1443, %v1511
      %v1544 = vadd.f32 %v1444, %v1512
      %v1545 = vadd.f32 %v1445, %v1513
      %v1546 = vadd.f32 %v1446, %v1514
      %v1547 = vadd.f32 %v1447, %v1515
      %v1548 = vadd.f32 %v1448, %v1516
      %v1549 = vadd.f32 %v1449, %v1517
      %v1550 = vadd.f32 %v1450, %v1518
      %v1551 = vadd.f32 %v1451, %v1519
      %v1552 = vadd.f32 %v1452, %v1520
      %v1553 = vadd.f32 %v1453, %v1521
      %v1554 = vadd.f32 %v1454, %v1522
      %v1555 = vadd.f32 %v1455, %v1523
      %v1556 = vadd.f32 %v1456, %v1524
      %v1557 = vadd.f32 %v1457, %v1525
      %v1558 = vadd.f32 %v1458, %v1526
      %v1559 = vadd.f32 %v1459, %v1527
      %v1560 = vadd.f32 %v1460, %v1528
      %v1561 = vadd.f32 %v1461, %v1529
      %1562 = vst.msk [vmem:[%s224] sm:$0xff] %vm225, %v1530
      %1563 = vst.msk [vmem:[%s224 + $0x8] sm:$0xff] %vm225, %v1531
      %1564 = vst.msk [vmem:[%s224 + $0x10] sm:$0xff] %vm225, %v1532
      %1565 = vst.msk [vmem:[%s224 + $0x18] sm:$0xff] %vm225, %v1533
      %1566 = vst.msk [vmem:[%s224 + $0x20] sm:$0xff] %vm225, %v1534
      %1567 = vst.msk [vmem:[%s224 + $0x28] sm:$0xff] %vm225, %v1535
      %1568 = vst.msk [vmem:[%s224 + $0x30] sm:$0xff] %vm225, %v1536
      %1569 = vst.msk [vmem:[%s224 + $0x38] sm:$0xff] %vm225, %v1537
      %1570 = vst.msk [vmem:[%s224 + $0x40] sm:$0xff] %vm225, %v1538
      %1571 = vst.msk [vmem:[%s224 + $0x48] sm:$0xff] %vm225, %v1539
      %1572 = vst.msk [vmem:[%s224 + $0x50] sm:$0xff] %vm225, %v1540
      %1573 = vst.msk [vmem:[%s224 + $0x58] sm:$0xff] %vm225, %v1541
      %1574 = vst.msk [vmem:[%s224 + $0x60] sm:$0xff] %vm225, %v1542
      %1575 = vst.msk [vmem:[%s224 + $0x68] sm:$0xff] %vm225, %v1543
      %1576 = vst.msk [vmem:[%s224 + $0x70] sm:$0xff] %vm225, %v1544
      %1577 = vst.msk [vmem:[%s224 + $0x78] sm:$0xff] %vm225, %v1545
      %1578 = vst.msk [vmem:[%s224 + $0x80] sm:$0xff] %vm225, %v1546
      %1579 = vst.msk [vmem:[%s224 + $0x88] sm:$0xff] %vm225, %v1547
      %1580 = vst.msk [vmem:[%s224 + $0x90] sm:$0xff] %vm225, %v1548
      %1581 = vst.msk [vmem:[%s224 + $0x98] sm:$0xff] %vm225, %v1549
      %1582 = vst.msk [vmem:[%s224 + $0xa0] sm:$0xff] %vm225, %v1550
      %1583 = vst.msk [vmem:[%s224 + $0xa8] sm:$0xff] %vm225, %v1551
      %1584 = vst.msk [vmem:[%s224 + $0xb0] sm:$0xff] %vm225, %v1552
      %1585 = vst.msk [vmem:[%s224 + $0xb8] sm:$0xff] %vm225, %v1553
      %1586 = vst.msk [vmem:[%s224 + $0xc0] sm:$0xff] %vm225, %v1554
      %1587 = vst.msk [vmem:[%s224 + $0xc8] sm:$0xff] %vm225, %v1555
      %1588 = vst.msk [vmem:[%s224 + $0xd0] sm:$0xff] %vm225, %v1556
      %1589 = vst.msk [vmem:[%s224 + $0xd8] sm:$0xff] %vm225, %v1557
      %1590 = vst.msk [vmem:[%s224 + $0xe0] sm:$0xff] %vm225, %v1558
      %1591 = vst.msk [vmem:[%s224 + $0xe8] sm:$0xff] %vm225, %v1559
      %1592 = vst.msk [vmem:[%s224 + $0xf0] sm:$0xff] %vm225, %v1560
      %1593 = vst.msk [vmem:[%s224 + $0xf8] sm:$0xff] %vm225, %v1561
      %p1594 = scmp.lt.s32.totalorder %s18, 1
      %s1595 = scalar_select %p1594, %s18, 1
      %p1596 = scmp.lt.s32.totalorder %s19, 0
      %s1597 = scalar_select %p1596, %s19, 0
      %s1598 = smul.addr %s1595, 32
      %s1599 = sadd.s32 %s1597, %s1598
      %s1600 = smul.addr %s1599, 8
      %s1601 = scalar_lea.vmem %s3, %s1600
      // Predicated region
      $region33: #{depthwise_separable_conv2d.1} parent=31 // pred_check
        %p1602 = pneg %p124
      $region34: #{depthwise_separable_conv2d.1} parent=31 // pred_check_branch
        %1604 = sbr.rel (%p1602) target = $region36
      $region35: #{depthwise_separable_conv2d.1} parent=31 // pred_region
        _
      $region36: #{depthwise_separable_conv2d.1} parent=31 // pred_fallthru
        _
    $region32: #{depthwise_separable_conv2d.1} parent=5 // pred_fallthru
      _
    %p1605 = scmp.le.s32.totalorder 2, %s9
    // Predicated region
    $region37: #{depthwise_separable_conv2d.1} parent=5 // pred_check
      %p1606 = pneg %p1605
    $region38: #{depthwise_separable_conv2d.1} parent=5 // pred_check_branch
      %1608 = sbr.rel (%p1606) target = $region40
    $region39: #{depthwise_separable_conv2d.1} parent=5 // pred_region
      %s1609 = ssub.s32 %s9, 2
      // Predicated region
      $region41: #{depthwise_separable_conv2d.1} parent=39 // pred_check
        %p1610 = pneg %p130
      $region42: #{depthwise_separable_conv2d.1} parent=39 // pred_check_branch
        %1612 = sbr.rel (%p1610) target = $region44
      $region43: #{depthwise_separable_conv2d.1} parent=39 // pred_region
        %p1613 = scmp.lt.s32.totalorder %s20, 1
        %s1614 = scalar_select %p1613, %s20, 1
        %p1615 = scmp.lt.s32.totalorder %s21, 0
        %s1616 = scalar_select %p1615, %s21, 0
        %s1617 = smul.addr %s1614, 32
        %s1618 = sadd.s32 %s1616, %s1617
        %s1619 = smul.addr %s1618, 8
        %s1620 = scalar_lea.vmem %s3, %s1619
      $region44: #{depthwise_separable_conv2d.1} parent=39 // pred_fallthru
        _
    $region40: #{depthwise_separable_conv2d.1} parent=5 // pred_fallthru
      _
  $region6: #{depthwise_separable_conv2d.1} parent=0 // loop_footer
    %s13 = sadd.s32 1, %s9
  $region7: #{depthwise_separable_conv2d.1} parent=0 // loop_footer_branch
    %8 = sbr.rel target = $region3
  $region8: #{depthwise_separable_conv2d.1} parent=0 // loop_exit
    _

</llo_original>
